<compile_context>
chip_gen: v5e
topology: v5e:2x2
jax: 0.10.0
libtpu: 0.0.40
codegen_flags: <defaults>
</compile_context>

<pallas_src>
import jax
import jax.numpy as jnp
from jax.experimental import pallas as pl
from jax.experimental.pallas import tpu as pltpu


def _beta_gamma_mf_kernel(z_ref, w_ref, o_ref):
    # z_ref: (TM, K) tile of logit_z
    # w_ref: (K, TN) tile of exp(log_w)
    # o_ref: (TM, TN) tile of the output
    acc = jnp.dot(z_ref[...], w_ref[...], preferred_element_type=jnp.float32)
    o_ref[...] = jax.nn.sigmoid(acc).astype(o_ref.dtype)


def _round_up(x, m):
    return ((x + m - 1) // m) * m


def beta_gamma_mf_forward(logit_z, log_w, *, tm=256, tn=256,
                          min_pallas_elems=1 << 18):
    """sigmoid(logit_z @ exp(log_w)); Pallas TPU kernel for nontrivial sizes."""
    M, K = logit_z.shape
    K2, N = log_w.shape
    assert K == K2, "inner dimensions must match"

    out_dtype = logit_z.dtype
    # exp(log_w) once, in f32 for accuracy, then cast to the matmul operand
    # dtype so bf16 callers feed bf16 operands to the MXU on v6e/v7x.
    w = jnp.exp(log_w.astype(jnp.float32)).astype(logit_z.dtype)

    # Tiny problems: kernel launch / per-step overhead dominates; let XLA fuse.
    if M * K * N < min_pallas_elems:
        return jax.nn.sigmoid(
            jnp.dot(logit_z, w, preferred_element_type=jnp.float32)
        ).astype(out_dtype)

    # MXU-aligned tiles, clamped so small dims don't force huge padding.
    tm_eff = min(tm, _round_up(M, 8))
    tn_eff = min(tn, _round_up(N, 128))
    Mp = _round_up(M, tm_eff)
    Np = _round_up(N, tn_eff)

    z_p = logit_z if Mp == M else jnp.pad(logit_z, ((0, Mp - M), (0, 0)))
    w_p = w if Np == N else jnp.pad(w, ((0, 0), (0, Np - N)))

    grid = (Mp // tm_eff, Np // tn_eff)

    itemsize = jnp.dtype(out_dtype).itemsize
    # Double-buffered z, w and out tiles + headroom; never below the default.
    vmem_est = 2 * (tm_eff * K + K * tn_eff + tm_eff * tn_eff) * itemsize
    vmem_limit = int(max(32 << 20, min(64 << 20, vmem_est + (4 << 20))))

    cost = pl.CostEstimate(
        flops=2 * Mp * K * Np,
        transcendentals=Mp * Np,  # in-kernel sigmoid (exp of w is in wrapper)
        bytes_accessed=itemsize * (Mp * K + K * Np + Mp * Np),
    )

    out_p = pl.pallas_call(
        _beta_gamma_mf_kernel,
        out_shape=jax.ShapeDtypeStruct((Mp, Np), out_dtype),
        grid_spec=pltpu.PrefetchScalarGridSpec(
            num_scalar_prefetch=0,
            grid=grid,
            in_specs=[
                pl.BlockSpec((tm_eff, K), lambda i, j: (i, 0)),
                pl.BlockSpec((K, tn_eff), lambda i, j: (0, j)),
            ],
            out_specs=pl.BlockSpec((tm_eff, tn_eff), lambda i, j: (i, j)),
        ),
        compiler_params=pltpu.CompilerParams(
            dimension_semantics=("parallel", "parallel"),
            vmem_limit_bytes=vmem_limit,
        ),
        cost_estimate=cost,
    )(z_p, w_p)

    return out_p[:M, :N]


def beta_gamma_mf_reference(logit_z, log_w):
    return jax.nn.sigmoid(logit_z @ jnp.exp(log_w))


if __name__ == "__main__":
    # Large enough to exercise the Pallas path (grid = (2, 1), tm=tn=256),
    # still small enough to run in a blink.
    M, K, N = 512, 128, 256
    key = jax.random.PRNGKey(0)
    k1, k2 = jax.random.split(key)
    logit_z = jax.random.normal(k1, (M, K), dtype=jnp.float32)
    # log-weights: small values so exp() is well behaved
    log_w = 0.1 * jax.random.normal(k2, (K, N), dtype=jnp.float32)

    out = beta_gamma_mf_forward(logit_z, log_w)
    out = jax.block_until_ready(out)

    ref = beta_gamma_mf_reference(logit_z, log_w)
    assert out.shape == (M, N)
    assert jnp.allclose(out, ref, atol=1e-4, rtol=1e-4), "mismatch vs reference"

    print("KERNEL_OK")
</pallas_src>

<mosaic_0001>
module attributes {stable_mosaic.version = 11 : i64} {
  func.func @_beta_gamma_mf_kernel(%arg0: i32, %arg1: i32, %arg2: memref<256x128xf32, #tpu.memory_space<vmem>>, %arg3: memref<128x256xf32, #tpu.memory_space<vmem>>, %arg4: memref<256x256xf32, #tpu.memory_space<vmem>>) attributes {dimension_semantics = [#tpu.dimension_semantics<parallel>, #tpu.dimension_semantics<parallel>], iteration_bounds = array<i64: 2, 1>, scalar_prefetch = 0 : i64, scratch_operands = 0 : i64, tpu.core_type = #tpu.core_type<tc>, window_params = [{transform_indices = @transform_0, window_bounds = array<i64: 256, 128>}, {transform_indices = @transform_1, window_bounds = array<i64: 128, 256>}, {transform_indices = @transform_2, window_bounds = array<i64: 256, 256>}]} {
    %c0 = arith.constant 0 : index
    %c0_0 = arith.constant 0 : index
    %0 = vector.load %arg2[%c0, %c0_0] : memref<256x128xf32, #tpu.memory_space<vmem>>, vector<256x128xf32>
    %c0_1 = arith.constant 0 : index
    %c0_2 = arith.constant 0 : index
    %1 = vector.load %arg3[%c0_1, %c0_2] : memref<128x256xf32, #tpu.memory_space<vmem>>, vector<128x256xf32>
    %cst = arith.constant dense<0.000000e+00> : vector<256x256xf32>
    %2 = tpu.matmul %0, %1, %cst {dimension_numbers = #tpu.dot_dimension_numbers<[1], [0], [0], [1], [0, 0, 1, 1], [], []>} : vector<256x128xf32>, vector<128x256xf32>, vector<256x256xf32> -> vector<256x256xf32>
    %3 = arith.negf %2 : vector<256x256xf32>
    %4 = math.exp %3 : vector<256x256xf32>
    %cst_3 = arith.constant 1.000000e+00 : f32
    %5 = vector.broadcast %cst_3 : f32 to vector<256x256xf32>
    %6 = arith.addf %5, %4 : vector<256x256xf32>
    %7 = arith.divf %5, %6 : vector<256x256xf32>
    %c0_4 = arith.constant 0 : index
    %c0_5 = arith.constant 0 : index
    %8 = vector.load %arg4[%c0_4, %c0_5] : memref<256x256xf32, #tpu.memory_space<vmem>>, vector<256x256xf32>
    tpu.vector_store %arg4[%c0_4, %c0_5], %7 {strides = array<i32>} : memref<256x256xf32, #tpu.memory_space<vmem>>, vector<256x256xf32>,
    return
  }
  func.func @transform_0(%arg0: i32, %arg1: i32) -> (i32, i32) {
    %c0_i32 = arith.constant 0 : i32
    %c0_i32_0 = arith.constant 0 : i32
    return %arg0, %c0_i32 : i32, i32
  }
  func.func @transform_1(%arg0: i32, %arg1: i32) -> (i32, i32) {
    %c0_i32 = arith.constant 0 : i32
    %c0_i32_0 = arith.constant 0 : i32
    return %c0_i32, %arg1 : i32, i32
  }
  func.func @transform_2(%arg0: i32, %arg1: i32) -> (i32, i32) {
    %c0_i32 = arith.constant 0 : i32
    return %arg0, %arg1 : i32, i32
  }
}

</mosaic_0001>

<llo_original>
// kernel: tpu_custom_call.1
$region0: #{tpu_custom_call.1}
  #allocation0 [shape = 'u32[]', space=smem, size = 0x4, offset = 0x4, fixed_abs, tag = 'smem constant byte address 0x4 - core index']
  #allocation1 [shape = 'u32[72,128]{1,0:T(1,128)}', space=vmem, size = 0x9000, scoped, tag = 'internal scratch']
  %s0 = inlined_call_operand.hbm [shape: f32[512,128], index: 0, kind: input, shape index: {}]
  %s1 = inlined_call_operand.hbm [shape: f32[128,256], index: 1, kind: input, shape index: {}]
  %s2 = inlined_call_operand.hbm [shape: f32[512,256], index: 2, kind: output, shape index: {}]
  %s3 = sld [smem:[#allocation0]]
  $region49: #{tpu_custom_call.1} parent=0
    _
  %s5 = ssub.s32 1, %s3
  %s6 = scalar_select 0, %s5, %s3
  $region1: #{tpu_custom_call.1} parent=0
    #allocation2 [shape = 'u8[262144]{0}', space=vmem, size = 0x40000, scoped, tag = 'input window, operand 0']
    #allocation3 [shape = 's32[2]{0}', space=sflag, size = 0x8, scoped, tag = 'scoped memory for tpu_custom_call.1']
    #allocation4 [shape = 's32[2]{0}', space=sflag, size = 0x8, scoped, tag = 'scoped memory for tpu_custom_call.1']
    #allocation5 [shape = 'u8[131072]{0}', space=vmem, size = 0x20000, scoped, tag = 'input window, operand 1, single buffered']
    #allocation6 [shape = 's32[1]{0}', space=sflag, size = 0x4, scoped, tag = 'scoped memory for tpu_custom_call.1']
    #allocation7 [shape = 'u8[524288]{0}', space=vmem, size = 0x80000, scoped, tag = 'output window, operand 0']
    %7 = vsyncpa [#allocation3], 0
    %s8 = scalar_lea.sflag [#allocation3], 1
    %9 = vsyncpa %s8, 0
    %10 = vsyncpa [#allocation6], 0
    %11 = vsyncpa [#allocation4], 0
    %s12 = scalar_lea.sflag [#allocation4], 1
    %13 = vsyncpa %s12, 0
    loop: start=0, step=1, limit=4
    $region2: #{tpu_custom_call.1} parent=1 // loop_pre_header
      _
    $region3: #{tpu_custom_call.1} parent=1 // loop_header
      %s15 = sphi 0, %s19
      %p16 = scmp.ge.s32.totalorder %s15, 4
      %s22 = sphi 0, %s34
      %s23 = sphi 0, %s30
      %s24 = sphi 0, %s22
      %s25 = sphi 0, %s23
      %s26 = sphi 0, %s24
      %s27 = sphi 0, %s25
      %s37 = sphi 0, %s39
      %s40 = sphi 0, %s37
      %s41 = sphi 0, %s40
      %s57 = sphi 0, %s41
      %s63 = sphi 0, %s65
      %s66 = sphi 0, %s63
      %s67 = sphi 0, %s66
      %s83 = sphi 0, %s67
      %s91 = sphi 0, %s93
      %s94 = sphi 0, %s91
      %s95 = sphi 0, %s94
      %s111 = sphi 0, %s95
    $region4: #{tpu_custom_call.1} parent=1 // loop_header_branch
      %18 = sbr.rel (%p16) target = $region8
    $region5: #{tpu_custom_call.1} parent=1 // loop_body
      %s20 = ssub.s32 %s15, 1
      %s21 = ssub.s32 %s15, 2
      %s28 = sadd.s32 1, %s23
      %p29 = scmp.ge.s32.totalorder %s28, 1
      %s30 = scalar_select %p29, 0, %s28
      %s31 = sadd.s32 1, %s22
      %s32 = scalar_select %p29, %s31, %s22
      %p33 = scmp.ge.s32.totalorder %s32, 2
      %s34 = scalar_select %p33, 0, %s32
      %s35 = ssub.s32 %s22, %s34
      %p36 = scmp.eq.s32.totalorder %s35, 0
      %s38 = sadd.s32 %s37, 1
      %s39 = scalar_select %p36, %s37, %s38
      %p42 = pneg %p36
      %p43 = scmp.eq.s32.totalorder %s15, 1
      %p44 = por %p42, %p43
      %p45 = scmp.ne.s32.totalorder %s37, %s40
      %p46 = scmp.eq.s32.totalorder %s15, 0
      %p47 = por %p45, %p46
      %p48 = scmp.ne.s32.totalorder %s37, %s40
      %p49 = scmp.eq.s32.totalorder %s20, 1
      %p50 = por %p48, %p49
      %p51 = scmp.ne.s32.totalorder %s40, %s41
      %p52 = scmp.eq.s32.totalorder %s20, 0
      %p53 = por %p51, %p52
      %p54 = scmp.ne.s32.totalorder %s40, %s41
      %p55 = scmp.eq.s32.totalorder %s21, 1
      %p56 = por %p54, %p55
      %p58 = scmp.ne.s32.totalorder %s41, %s57
      %p59 = scmp.eq.s32.totalorder %s21, 0
      %p60 = por %p58, %p59
      %s61 = ssub.s32 %s23, %s30
      %p62 = scmp.eq.s32.totalorder %s61, 0
      %s64 = sadd.s32 %s63, 1
      %s65 = scalar_select %p62, %s63, %s64
      %p68 = pneg %p62
      %p69 = scmp.eq.s32.totalorder %s15, 1
      %p70 = por %p68, %p69
      %p71 = scmp.ne.s32.totalorder %s63, %s66
      %p72 = scmp.eq.s32.totalorder %s15, 0
      %p73 = por %p71, %p72
      %p74 = scmp.ne.s32.totalorder %s63, %s66
      %p75 = scmp.eq.s32.totalorder %s20, 1
      %p76 = por %p74, %p75
      %p77 = scmp.ne.s32.totalorder %s66, %s67
      %p78 = scmp.eq.s32.totalorder %s20, 0
      %p79 = por %p77, %p78
      %p80 = scmp.ne.s32.totalorder %s66, %s67
      %p81 = scmp.eq.s32.totalorder %s21, 1
      %p82 = por %p80, %p81
      %p84 = scmp.ne.s32.totalorder %s67, %s83
      %p85 = scmp.eq.s32.totalorder %s21, 0
      %p86 = por %p84, %p85
      %s87 = ssub.s32 %s22, %s34
      %s88 = ssub.s32 %s23, %s30
      %s89 = sor.u32 %s87, %s88
      %p90 = scmp.eq.s32.totalorder %s89, 0
      %s92 = sadd.s32 %s91, 1
      %s93 = scalar_select %p90, %s91, %s92
      %p96 = pneg %p90
      %p97 = scmp.eq.s32.totalorder %s15, 1
      %p98 = por %p96, %p97
      %p99 = scmp.ne.s32.totalorder %s91, %s94
      %p100 = scmp.eq.s32.totalorder %s15, 0
      %p101 = por %p99, %p100
      %p102 = scmp.ne.s32.totalorder %s91, %s94
      %p103 = scmp.eq.s32.totalorder %s20, 1
      %p104 = por %p102, %p103
      %p105 = scmp.ne.s32.totalorder %s94, %s95
      %p106 = scmp.eq.s32.totalorder %s20, 0
      %p107 = por %p105, %p106
      %p108 = scmp.ne.s32.totalorder %s94, %s95
      %p109 = scmp.eq.s32.totalorder %s21, 1
      %p110 = por %p108, %p109
      %p112 = scmp.ne.s32.totalorder %s95, %s111
      %p113 = scmp.eq.s32.totalorder %s21, 0
      %p114 = por %p112, %p113
      %p115 = scmp.le.s32.totalorder 1, %s15
      %p116 = scmp.lt.s32.totalorder %s15, 3
      %p117 = pnand %p115, %p116
      %p118 = pneg %p117
      // Predicated region
      $region9: #{tpu_custom_call.1} parent=5 // pred_check
        _
      $region10: #{tpu_custom_call.1} parent=5 // pred_check_branch
        %120 = sbr.rel (%p117) target = $region12
      $region11: #{tpu_custom_call.1} parent=5 // pred_region
        %s121 = ssub.s32 %s15, 1
        // Predicated region
        $region13: #{tpu_custom_call.1} parent=11 // pred_check
          %p122 = pneg %p79
        $region14: #{tpu_custom_call.1} parent=11 // pred_check_branch
          %124 = sbr.rel (%p122) target = $region16
        $region15: #{tpu_custom_call.1} parent=11 // pred_region
          %s125 = smul.u32 2, %s25
          %127 = vsyncadd [#allocation6], 0
          %s128 = smul.addr %s125, 8
          %s129 = scalar_lea.hbm %s1, %s128
          %s130 = sshll.u32 %s129, 4
          %s131 = int_to_ptr.hbm [resolvable:$true] %s130
          %s132 = sshll.u32 [#allocation5], 4
          %s133 = int_to_ptr.vmem [resolvable:$true] %s132
          %138 = dma.hbm_to_vmem [thread:$0]  %s131, 4096, %s133, [#allocation6], 256, 256, 16
        $region16: #{tpu_custom_call.1} parent=11 // pred_fallthru
          _
      $region12: #{tpu_custom_call.1} parent=5 // pred_fallthru
        _
      %p139 = scmp.lt.s32.totalorder %s15, 2
      // Predicated region
      $region17: #{tpu_custom_call.1} parent=5 // pred_check
        %p140 = pneg %p139
      $region18: #{tpu_custom_call.1} parent=5 // pred_check_branch
        %142 = sbr.rel (%p140) target = $region20
      $region19: #{tpu_custom_call.1} parent=5 // pred_region
        // Predicated region
        $region21: #{tpu_custom_call.1} parent=19 // pred_check
          %p143 = pneg %p47
        $region22: #{tpu_custom_call.1} parent=19 // pred_check_branch
          %145 = sbr.rel (%p143) target = $region24
        $region23: #{tpu_custom_call.1} parent=19 // pred_region
          %s146 = sand.u32 %s37, 1
          %s147 = scalar_lea.sflag [#allocation3], %s146
          %s148 = sand.u32 %s37, 1
          %s149 = smul.addr %s148, 256
          %s150 = scalar_lea.vmem [#allocation2], %s149
          %s151 = smul.u32 32, %s22
          %153 = vsyncadd %s147, 0
          %s154 = smul.addr %s151, 8
          %s155 = scalar_lea.hbm %s0, %s154
          %s156 = sshll.u32 %s155, 4
          %s157 = int_to_ptr.hbm [resolvable:$true] %s156
          %s158 = sshll.u32 %s150, 4
          %s159 = int_to_ptr.vmem [resolvable:$true] %s158
          %164 = dma.hbm_to_vmem [thread:$0]  %s157, 4096, %s159, %s147, 128, 128, 8
        $region24: #{tpu_custom_call.1} parent=19 // pred_fallthru
          _
      $region20: #{tpu_custom_call.1} parent=5 // pred_fallthru
        _
      %p165 = scmp.le.s32.totalorder 1, %s15
      %p166 = scmp.lt.s32.totalorder %s15, 3
      %p167 = pnand %p165, %p166
      %p168 = pneg %p167
      // Predicated region
      $region25: #{tpu_custom_call.1} parent=5 // pred_check
        _
      $region26: #{tpu_custom_call.1} parent=5 // pred_check_branch
        %170 = sbr.rel (%p167) target = $region28
      $region27: #{tpu_custom_call.1} parent=5 // pred_region
        %s171 = ssub.s32 %s15, 1
        %s172 = sand.u32 %s40, 1
        %s173 = scalar_lea.sflag [#allocation3], %s172
        %s174 = sand.u32 %s40, 1
        %s175 = smul.addr %s174, 256
        %s176 = scalar_lea.vmem [#allocation2], %s175
        // Predicated region
        $region29: #{tpu_custom_call.1} parent=27 // pred_check
          %p177 = pneg %p53
        $region30: #{tpu_custom_call.1} parent=27 // pred_check_branch
          %179 = sbr.rel (%p177) target = $region32
        $region31: #{tpu_custom_call.1} parent=27 // pred_region
          %181 = dma.done %s173, 4096
        $region32: #{tpu_custom_call.1} parent=27 // pred_fallthru
          _
        // Predicated region
        $region33: #{tpu_custom_call.1} parent=27 // pred_check
          %p182 = pneg %p79
        $region34: #{tpu_custom_call.1} parent=27 // pred_check_branch
          %184 = sbr.rel (%p182) target = $region36
        $region35: #{tpu_custom_call.1} parent=27 // pred_region
          %186 = dma.done [#allocation6], 4096
        $region36: #{tpu_custom_call.1} parent=27 // pred_fallthru
          _
        %s187 = sand.u32 %s40, 1
        %s188 = scalar_lea.sflag [#allocation3], %s187
        %s189 = sand.u32 %s40, 1
        %s190 = smul.addr %s189, 256
        %s191 = scalar_lea.vmem [#allocation2], %s190
        %p192 = pneg %p53
        %p193 = pneg %p50
        %p194 = pneg %p79
        %p195 = pneg %p76
        %p196 = pneg %p107
        %p197 = pneg %p104
        %s198 = sand.u32 %s94, 1
        %s199 = scalar_lea.sflag [#allocation4], %s198
        %s200 = sand.u32 %s94, 1
        %s201 = smul.addr %s200, 512
        %s202 = scalar_lea.vmem [#allocation7], %s201
        %s203 = smul.u32 32, %s24
        %s204 = smul.u32 2, %s25
        %s205 = smul.u32 32, %s24
        %s206 = smul.u32 2, %s25
        %v207 = vld [vmem:[%s176] sm:$0xff]
        %v208 = vld [vmem:[%s176 + $0x8] sm:$0xff]
        %v209 = vld [vmem:[%s176 + $0x10] sm:$0xff]
        %v210 = vld [vmem:[%s176 + $0x18] sm:$0xff]
        %v211 = vld [vmem:[%s176 + $0x20] sm:$0xff]
        %v212 = vld [vmem:[%s176 + $0x28] sm:$0xff]
        %v213 = vld [vmem:[%s176 + $0x30] sm:$0xff]
        %v214 = vld [vmem:[%s176 + $0x38] sm:$0xff]
        %v215 = vld [vmem:[%s176 + $0x40] sm:$0xff]
        %v216 = vld [vmem:[%s176 + $0x48] sm:$0xff]
        %v217 = vld [vmem:[%s176 + $0x50] sm:$0xff]
        %v218 = vld [vmem:[%s176 + $0x58] sm:$0xff]
        %v219 = vld [vmem:[%s176 + $0x60] sm:$0xff]
        %v220 = vld [vmem:[%s176 + $0x68] sm:$0xff]
        %v221 = vld [vmem:[%s176 + $0x70] sm:$0xff]
        %v222 = vld [vmem:[%s176 + $0x78] sm:$0xff]
        %v223 = vld [vmem:[%s176 + $0x80] sm:$0xff]
        %v224 = vld [vmem:[%s176 + $0x88] sm:$0xff]
        %v225 = vld [vmem:[%s176 + $0x90] sm:$0xff]
        %v226 = vld [vmem:[%s176 + $0x98] sm:$0xff]
        %v227 = vld [vmem:[%s176 + $0xa0] sm:$0xff]
        %v228 = vld [vmem:[%s176 + $0xa8] sm:$0xff]
        %v229 = vld [vmem:[%s176 + $0xb0] sm:$0xff]
        %v230 = vld [vmem:[%s176 + $0xb8] sm:$0xff]
        %v231 = vld [vmem:[%s176 + $0xc0] sm:$0xff]
        %v232 = vld [vmem:[%s176 + $0xc8] sm:$0xff]
        %v233 = vld [vmem:[%s176 + $0xd0] sm:$0xff]
        %v234 = vld [vmem:[%s176 + $0xd8] sm:$0xff]
        %v235 = vld [vmem:[%s176 + $0xe0] sm:$0xff]
        %v236 = vld [vmem:[%s176 + $0xe8] sm:$0xff]
        %v237 = vld [vmem:[%s176 + $0xf0] sm:$0xff]
        %v238 = vld [vmem:[%s176 + $0xf8] sm:$0xff]
        %v239 = vld [vmem:[#allocation5] sm:$0xff]
        %v240 = vld [vmem:[#allocation5 + $0x8] sm:$0xff]
        %v241 = vld [vmem:[#allocation5 + $0x10] sm:$0xff]
        %v242 = vld [vmem:[#allocation5 + $0x18] sm:$0xff]
        %v243 = vld [vmem:[#allocation5 + $0x20] sm:$0xff]
        %v244 = vld [vmem:[#allocation5 + $0x28] sm:$0xff]
        %v245 = vld [vmem:[#allocation5 + $0x30] sm:$0xff]
        %v246 = vld [vmem:[#allocation5 + $0x38] sm:$0xff]
        %v247 = vld [vmem:[#allocation5 + $0x40] sm:$0xff]
        %v248 = vld [vmem:[#allocation5 + $0x48] sm:$0xff]
        %v249 = vld [vmem:[#allocation5 + $0x50] sm:$0xff]
        %v250 = vld [vmem:[#allocation5 + $0x58] sm:$0xff]
        %v251 = vld [vmem:[#allocation5 + $0x60] sm:$0xff]
        %v252 = vld [vmem:[#allocation5 + $0x68] sm:$0xff]
        %v253 = vld [vmem:[#allocation5 + $0x70] sm:$0xff]
        %v254 = vld [vmem:[#allocation5 + $0x78] sm:$0xff]
        %v255 = vld [vmem:[#allocation5 + $0x80] sm:$0xff]
        %v256 = vld [vmem:[#allocation5 + $0x88] sm:$0xff]
        %v257 = vld [vmem:[#allocation5 + $0x90] sm:$0xff]
        %v258 = vld [vmem:[#allocation5 + $0x98] sm:$0xff]
        %v259 = vld [vmem:[#allocation5 + $0xa0] sm:$0xff]
        %v260 = vld [vmem:[#allocation5 + $0xa8] sm:$0xff]
        %v261 = vld [vmem:[#allocation5 + $0xb0] sm:$0xff]
        %v262 = vld [vmem:[#allocation5 + $0xb8] sm:$0xff]
        %v263 = vld [vmem:[#allocation5 + $0xc0] sm:$0xff]
        %v264 = vld [vmem:[#allocation5 + $0xc8] sm:$0xff]
        %v265 = vld [vmem:[#allocation5 + $0xd0] sm:$0xff]
        %v266 = vld [vmem:[#allocation5 + $0xd8] sm:$0xff]
        %v267 = vld [vmem:[#allocation5 + $0xe0] sm:$0xff]
        %v268 = vld [vmem:[#allocation5 + $0xe8] sm:$0xff]
        %v269 = vld [vmem:[#allocation5 + $0xf0] sm:$0xff]
        %v270 = vld [vmem:[#allocation5 + $0xf8] sm:$0xff]
        %271 = vmatpush.msra.mxu0 %v269
        %272 = vmatpush.msra.mxu0 %v267
        %273 = vmatpush.msra.mxu0 %v265
        %274 = vmatpush.msra.mxu0 %v263
        %275 = vmatpush.msra.mxu0 %v261
        %276 = vmatpush.msra.mxu0 %v259
        %277 = vmatpush.msra.mxu0 %v257
        %278 = vmatpush.msra.mxu0 %v255
        %279 = vmatpush.msra.mxu0 %v253
        %280 = vmatpush.msra.mxu0 %v251
        %281 = vmatpush.msra.mxu0 %v249
        %282 = vmatpush.msra.mxu0 %v247
        %283 = vmatpush.msra.mxu0 %v245
        %284 = vmatpush.msra.mxu0 %v243
        %285 = vmatpush.msra.mxu0 %v241
        %286 = vmatpush.msra.mxu0 %v239
        %287 = vmatmul.f32.gmra.mxu0 %v207
        %v288 = vpop.f32.mrf.mxu0
        %v289 = vadd.f32 0.0, %v288
        %290 = vmatmul.f32.gmra.mxu0 %v208
        %v291 = vpop.f32.mrf.mxu0
        %v292 = vadd.f32 0.0, %v291
        %293 = vmatmul.f32.gmra.mxu0 %v209
        %v294 = vpop.f32.mrf.mxu0
        %v295 = vadd.f32 0.0, %v294
        %296 = vmatmul.f32.gmra.mxu0 %v210
        %v297 = vpop.f32.mrf.mxu0
        %v298 = vadd.f32 0.0, %v297
        %299 = vmatmul.f32.gmra.mxu0 %v211
        %v300 = vpop.f32.mrf.mxu0
        %v301 = vadd.f32 0.0, %v300
        %302 = vmatmul.f32.gmra.mxu0 %v212
        %v303 = vpop.f32.mrf.mxu0
        %v304 = vadd.f32 0.0, %v303
        %305 = vmatmul.f32.gmra.mxu0 %v213
        %v306 = vpop.f32.mrf.mxu0
        %v307 = vadd.f32 0.0, %v306
        %308 = vmatmul.f32.gmra.mxu0 %v214
        %v309 = vpop.f32.mrf.mxu0
        %v310 = vadd.f32 0.0, %v309
        %311 = vmatmul.f32.gmra.mxu0 %v215
        %v312 = vpop.f32.mrf.mxu0
        %v313 = vadd.f32 0.0, %v312
        %314 = vmatmul.f32.gmra.mxu0 %v216
        %v315 = vpop.f32.mrf.mxu0
        %v316 = vadd.f32 0.0, %v315
        %317 = vmatmul.f32.gmra.mxu0 %v217
        %v318 = vpop.f32.mrf.mxu0
        %v319 = vadd.f32 0.0, %v318
        %320 = vmatmul.f32.gmra.mxu0 %v218
        %v321 = vpop.f32.mrf.mxu0
        %v322 = vadd.f32 0.0, %v321
        %323 = vmatmul.f32.gmra.mxu0 %v219
        %v324 = vpop.f32.mrf.mxu0
        %v325 = vadd.f32 0.0, %v324
        %326 = vmatmul.f32.gmra.mxu0 %v220
        %v327 = vpop.f32.mrf.mxu0
        %v328 = vadd.f32 0.0, %v327
        %329 = vmatmul.f32.gmra.mxu0 %v221
        %v330 = vpop.f32.mrf.mxu0
        %v331 = vadd.f32 0.0, %v330
        %332 = vmatmul.f32.gmra.mxu0 %v222
        %v333 = vpop.f32.mrf.mxu0
        %v334 = vadd.f32 0.0, %v333
        %335 = vmatmul.f32.gmra.mxu0 %v223
        %v336 = vpop.f32.mrf.mxu0
        %v337 = vadd.f32 0.0, %v336
        %338 = vmatmul.f32.gmra.mxu0 %v224
        %v339 = vpop.f32.mrf.mxu0
        %v340 = vadd.f32 0.0, %v339
        %341 = vmatmul.f32.gmra.mxu0 %v225
        %v342 = vpop.f32.mrf.mxu0
        %v343 = vadd.f32 0.0, %v342
        %344 = vmatmul.f32.gmra.mxu0 %v226
        %v345 = vpop.f32.mrf.mxu0
        %v346 = vadd.f32 0.0, %v345
        %347 = vmatmul.f32.gmra.mxu0 %v227
        %v348 = vpop.f32.mrf.mxu0
        %v349 = vadd.f32 0.0, %v348
        %350 = vmatmul.f32.gmra.mxu0 %v228
        %v351 = vpop.f32.mrf.mxu0
        %v352 = vadd.f32 0.0, %v351
        %353 = vmatmul.f32.gmra.mxu0 %v229
        %v354 = vpop.f32.mrf.mxu0
        %v355 = vadd.f32 0.0, %v354
        %356 = vmatmul.f32.gmra.mxu0 %v230
        %v357 = vpop.f32.mrf.mxu0
        %v358 = vadd.f32 0.0, %v357
        %359 = vmatmul.f32.gmra.mxu0 %v231
        %v360 = vpop.f32.mrf.mxu0
        %v361 = vadd.f32 0.0, %v360
        %362 = vmatmul.f32.gmra.mxu0 %v232
        %v363 = vpop.f32.mrf.mxu0
        %v364 = vadd.f32 0.0, %v363
        %365 = vmatmul.f32.gmra.mxu0 %v233
        %v366 = vpop.f32.mrf.mxu0
        %v367 = vadd.f32 0.0, %v366
        %368 = vmatmul.f32.gmra.mxu0 %v234
        %v369 = vpop.f32.mrf.mxu0
        %v370 = vadd.f32 0.0, %v369
        %371 = vmatmul.f32.gmra.mxu0 %v235
        %v372 = vpop.f32.mrf.mxu0
        %v373 = vadd.f32 0.0, %v372
        %374 = vmatmul.f32.gmra.mxu0 %v236
        %v375 = vpop.f32.mrf.mxu0
        %v376 = vadd.f32 0.0, %v375
        %377 = vmatmul.f32.gmra.mxu0 %v237
        %v378 = vpop.f32.mrf.mxu0
        %v379 = vadd.f32 0.0, %v378
        %380 = vmatmul.f32.gmra.mxu0 %v238
        %v381 = vpop.f32.mrf.mxu0
        %v382 = vadd.f32 0.0, %v381
        %383 = vdwg.mxu0
        %384 = vmatpush.msra.mxu0 %v270
        %385 = vmatpush.msra.mxu0 %v268
        %386 = vmatpush.msra.mxu0 %v266
        %387 = vmatpush.msra.mxu0 %v264
        %388 = vmatpush.msra.mxu0 %v262
        %389 = vmatpush.msra.mxu0 %v260
        %390 = vmatpush.msra.mxu0 %v258
        %391 = vmatpush.msra.mxu0 %v256
        %392 = vmatpush.msra.mxu0 %v254
        %393 = vmatpush.msra.mxu0 %v252
        %394 = vmatpush.msra.mxu0 %v250
        %395 = vmatpush.msra.mxu0 %v248
        %396 = vmatpush.msra.mxu0 %v246
        %397 = vmatpush.msra.mxu0 %v244
        %398 = vmatpush.msra.mxu0 %v242
        %399 = vmatpush.msra.mxu0 %v240
        %400 = vmatmul.f32.gmra.mxu0 %v207
        %v401 = vpop.f32.mrf.mxu0
        %v402 = vadd.f32 0.0, %v401
        %403 = vmatmul.f32.gmra.mxu0 %v208
        %v404 = vpop.f32.mrf.mxu0
        %v405 = vadd.f32 0.0, %v404
        %406 = vmatmul.f32.gmra.mxu0 %v209
        %v407 = vpop.f32.mrf.mxu0
        %v408 = vadd.f32 0.0, %v407
        %409 = vmatmul.f32.gmra.mxu0 %v210
        %v410 = vpop.f32.mrf.mxu0
        %v411 = vadd.f32 0.0, %v410
        %412 = vmatmul.f32.gmra.mxu0 %v211
        %v413 = vpop.f32.mrf.mxu0
        %v414 = vadd.f32 0.0, %v413
        %415 = vmatmul.f32.gmra.mxu0 %v212
        %v416 = vpop.f32.mrf.mxu0
        %v417 = vadd.f32 0.0, %v416
        %418 = vmatmul.f32.gmra.mxu0 %v213
        %v419 = vpop.f32.mrf.mxu0
        %v420 = vadd.f32 0.0, %v419
        %421 = vmatmul.f32.gmra.mxu0 %v214
        %v422 = vpop.f32.mrf.mxu0
        %v423 = vadd.f32 0.0, %v422
        %424 = vmatmul.f32.gmra.mxu0 %v215
        %v425 = vpop.f32.mrf.mxu0
        %v426 = vadd.f32 0.0, %v425
        %427 = vmatmul.f32.gmra.mxu0 %v216
        %v428 = vpop.f32.mrf.mxu0
        %v429 = vadd.f32 0.0, %v428
        %430 = vmatmul.f32.gmra.mxu0 %v217
        %v431 = vpop.f32.mrf.mxu0
        %v432 = vadd.f32 0.0, %v431
        %433 = vmatmul.f32.gmra.mxu0 %v218
        %v434 = vpop.f32.mrf.mxu0
        %v435 = vadd.f32 0.0, %v434
        %436 = vmatmul.f32.gmra.mxu0 %v219
        %v437 = vpop.f32.mrf.mxu0
        %v438 = vadd.f32 0.0, %v437
        %439 = vmatmul.f32.gmra.mxu0 %v220
        %v440 = vpop.f32.mrf.mxu0
        %v441 = vadd.f32 0.0, %v440
        %442 = vmatmul.f32.gmra.mxu0 %v221
        %v443 = vpop.f32.mrf.mxu0
        %v444 = vadd.f32 0.0, %v443
        %445 = vmatmul.f32.gmra.mxu0 %v222
        %v446 = vpop.f32.mrf.mxu0
        %v447 = vadd.f32 0.0, %v446
        %448 = vmatmul.f32.gmra.mxu0 %v223
        %v449 = vpop.f32.mrf.mxu0
        %v450 = vadd.f32 0.0, %v449
        %451 = vmatmul.f32.gmra.mxu0 %v224
        %v452 = vpop.f32.mrf.mxu0
        %v453 = vadd.f32 0.0, %v452
        %454 = vmatmul.f32.gmra.mxu0 %v225
        %v455 = vpop.f32.mrf.mxu0
        %v456 = vadd.f32 0.0, %v455
        %457 = vmatmul.f32.gmra.mxu0 %v226
        %v458 = vpop.f32.mrf.mxu0
        %v459 = vadd.f32 0.0, %v458
        %460 = vmatmul.f32.gmra.mxu0 %v227
        %v461 = vpop.f32.mrf.mxu0
        %v462 = vadd.f32 0.0, %v461
        %463 = vmatmul.f32.gmra.mxu0 %v228
        %v464 = vpop.f32.mrf.mxu0
        %v465 = vadd.f32 0.0, %v464
        %466 = vmatmul.f32.gmra.mxu0 %v229
        %v467 = vpop.f32.mrf.mxu0
        %v468 = vadd.f32 0.0, %v467
        %469 = vmatmul.f32.gmra.mxu0 %v230
        %v470 = vpop.f32.mrf.mxu0
        %v471 = vadd.f32 0.0, %v470
        %472 = vmatmul.f32.gmra.mxu0 %v231
        %v473 = vpop.f32.mrf.mxu0
        %v474 = vadd.f32 0.0, %v473
        %475 = vmatmul.f32.gmra.mxu0 %v232
        %v476 = vpop.f32.mrf.mxu0
        %v477 = vadd.f32 0.0, %v476
        %478 = vmatmul.f32.gmra.mxu0 %v233
        %v479 = vpop.f32.mrf.mxu0
        %v480 = vadd.f32 0.0, %v479
        %481 = vmatmul.f32.gmra.mxu0 %v234
        %v482 = vpop.f32.mrf.mxu0
        %v483 = vadd.f32 0.0, %v482
        %484 = vmatmul.f32.gmra.mxu0 %v235
        %v485 = vpop.f32.mrf.mxu0
        %v486 = vadd.f32 0.0, %v485
        %487 = vmatmul.f32.gmra.mxu0 %v236
        %v488 = vpop.f32.mrf.mxu0
        %v489 = vadd.f32 0.0, %v488
        %490 = vmatmul.f32.gmra.mxu0 %v237
        %v491 = vpop.f32.mrf.mxu0
        %v492 = vadd.f32 0.0, %v491
        %493 = vmatmul.f32.gmra.mxu0 %v238
        %v494 = vpop.f32.mrf.mxu0
        %v495 = vadd.f32 0.0, %v494
        %496 = vdwg.mxu0
        %v497 = vxor.u32 %v289, 2147483648
        %v498 = vxor.u32 %v402, 2147483648
        %v499 = vxor.u32 %v292, 2147483648
        %v500 = vxor.u32 %v405, 2147483648
        %v501 = vxor.u32 %v295, 2147483648
        %v502 = vxor.u32 %v408, 2147483648
        %v503 = vxor.u32 %v298, 2147483648
        %v504 = vxor.u32 %v411, 2147483648
        %v505 = vxor.u32 %v301, 2147483648
        %v506 = vxor.u32 %v414, 2147483648
        %v507 = vxor.u32 %v304, 2147483648
        %v508 = vxor.u32 %v417, 2147483648
        %v509 = vxor.u32 %v307, 2147483648
        %v510 = vxor.u32 %v420, 2147483648
        %v511 = vxor.u32 %v310, 2147483648
        %v512 = vxor.u32 %v423, 2147483648
        %v513 = vxor.u32 %v313, 2147483648
        %v514 = vxor.u32 %v426, 2147483648
        %v515 = vxor.u32 %v316, 2147483648
        %v516 = vxor.u32 %v429, 2147483648
        %v517 = vxor.u32 %v319, 2147483648
        %v518 = vxor.u32 %v432, 2147483648
        %v519 = vxor.u32 %v322, 2147483648
        %v520 = vxor.u32 %v435, 2147483648
        %v521 = vxor.u32 %v325, 2147483648
        %v522 = vxor.u32 %v438, 2147483648
        %v523 = vxor.u32 %v328, 2147483648
        %v524 = vxor.u32 %v441, 2147483648
        %v525 = vxor.u32 %v331, 2147483648
        %v526 = vxor.u32 %v444, 2147483648
        %v527 = vxor.u32 %v334, 2147483648
        %v528 = vxor.u32 %v447, 2147483648
        %v529 = vxor.u32 %v337, 2147483648
        %v530 = vxor.u32 %v450, 2147483648
        %v531 = vxor.u32 %v340, 2147483648
        %v532 = vxor.u32 %v453, 2147483648
        %v533 = vxor.u32 %v343, 2147483648
        %v534 = vxor.u32 %v456, 2147483648
        %v535 = vxor.u32 %v346, 2147483648
        %v536 = vxor.u32 %v459, 2147483648
        %v537 = vxor.u32 %v349, 2147483648
        %v538 = vxor.u32 %v462, 2147483648
        %v539 = vxor.u32 %v352, 2147483648
        %v540 = vxor.u32 %v465, 2147483648
        %v541 = vxor.u32 %v355, 2147483648
        %v542 = vxor.u32 %v468, 2147483648
        %v543 = vxor.u32 %v358, 2147483648
        %v544 = vxor.u32 %v471, 2147483648
        %v545 = vxor.u32 %v361, 2147483648
        %v546 = vxor.u32 %v474, 2147483648
        %v547 = vxor.u32 %v364, 2147483648
        %v548 = vxor.u32 %v477, 2147483648
        %v549 = vxor.u32 %v367, 2147483648
        %v550 = vxor.u32 %v480, 2147483648
        %v551 = vxor.u32 %v370, 2147483648
        %v552 = vxor.u32 %v483, 2147483648
        %v553 = vxor.u32 %v373, 2147483648
        %v554 = vxor.u32 %v486, 2147483648
        %v555 = vxor.u32 %v376, 2147483648
        %v556 = vxor.u32 %v489, 2147483648
        %v557 = vxor.u32 %v379, 2147483648
        %v558 = vxor.u32 %v492, 2147483648
        %v559 = vxor.u32 %v382, 2147483648
        %v560 = vxor.u32 %v495, 2147483648
        %v561 = vmul.f32 %v497, 1.442695
        %v562 = vpow.pop %v561
        %v563 = vmul.f32 %v498, 1.442695
        %v564 = vpow.pop %v563
        %v565 = vmul.f32 %v499, 1.442695
        %v566 = vpow.pop %v565
        %v567 = vmul.f32 %v500, 1.442695
        %v568 = vpow.pop %v567
        %v569 = vmul.f32 %v501, 1.442695
        %v570 = vpow.pop %v569
        %v571 = vmul.f32 %v502, 1.442695
        %v572 = vpow.pop %v571
        %v573 = vmul.f32 %v503, 1.442695
        %v574 = vpow.pop %v573
        %v575 = vmul.f32 %v504, 1.442695
        %v576 = vpow.pop %v575
        %v577 = vmul.f32 %v505, 1.442695
        %v578 = vpow.pop %v577
        %v579 = vmul.f32 %v506, 1.442695
        %v580 = vpow.pop %v579
        %v581 = vmul.f32 %v507, 1.442695
        %v582 = vpow.pop %v581
        %v583 = vmul.f32 %v508, 1.442695
        %v584 = vpow.pop %v583
        %v585 = vmul.f32 %v509, 1.442695
        %v586 = vpow.pop %v585
        %v587 = vmul.f32 %v510, 1.442695
        %v588 = vpow.pop %v587
        %v589 = vmul.f32 %v511, 1.442695
        %v590 = vpow.pop %v589
        %v591 = vmul.f32 %v512, 1.442695
        %v592 = vpow.pop %v591
        %v593 = vmul.f32 %v513, 1.442695
        %v594 = vpow.pop %v593
        %v595 = vmul.f32 %v514, 1.442695
        %v596 = vpow.pop %v595
        %v597 = vmul.f32 %v515, 1.442695
        %v598 = vpow.pop %v597
        %v599 = vmul.f32 %v516, 1.442695
        %v600 = vpow.pop %v599
        %v601 = vmul.f32 %v517, 1.442695
        %v602 = vpow.pop %v601
        %v603 = vmul.f32 %v518, 1.442695
        %v604 = vpow.pop %v603
        %v605 = vmul.f32 %v519, 1.442695
        %v606 = vpow.pop %v605
        %v607 = vmul.f32 %v520, 1.442695
        %v608 = vpow.pop %v607
        %v609 = vmul.f32 %v521, 1.442695
        %v610 = vpow.pop %v609
        %v611 = vmul.f32 %v522, 1.442695
        %v612 = vpow.pop %v611
        %v613 = vmul.f32 %v523, 1.442695
        %v614 = vpow.pop %v613
        %v615 = vmul.f32 %v524, 1.442695
        %v616 = vpow.pop %v615
        %v617 = vmul.f32 %v525, 1.442695
        %v618 = vpow.pop %v617
        %v619 = vmul.f32 %v526, 1.442695
        %v620 = vpow.pop %v619
        %v621 = vmul.f32 %v527, 1.442695
        %v622 = vpow.pop %v621
        %v623 = vmul.f32 %v528, 1.442695
        %v624 = vpow.pop %v623
        %v625 = vmul.f32 %v529, 1.442695
        %v626 = vpow.pop %v625
        %v627 = vmul.f32 %v530, 1.442695
        %v628 = vpow.pop %v627
        %v629 = vmul.f32 %v531, 1.442695
        %v630 = vpow.pop %v629
        %v631 = vmul.f32 %v532, 1.442695
        %v632 = vpow.pop %v631
        %v633 = vmul.f32 %v533, 1.442695
        %v634 = vpow.pop %v633
        %v635 = vmul.f32 %v534, 1.442695
        %v636 = vpow.pop %v635
        %v637 = vmul.f32 %v535, 1.442695
        %v638 = vpow.pop %v637
        %v639 = vmul.f32 %v536, 1.442695
        %v640 = vpow.pop %v639
        %v641 = vmul.f32 %v537, 1.442695
        %v642 = vpow.pop %v641
        %v643 = vmul.f32 %v538, 1.442695
        %v644 = vpow.pop %v643
        %v645 = vmul.f32 %v539, 1.442695
        %v646 = vpow.pop %v645
        %v647 = vmul.f32 %v540, 1.442695
        %v648 = vpow.pop %v647
        %v649 = vmul.f32 %v541, 1.442695
        %v650 = vpow.pop %v649
        %v651 = vmul.f32 %v542, 1.442695
        %v652 = vpow.pop %v651
        %v653 = vmul.f32 %v543, 1.442695
        %v654 = vpow.pop %v653
        %v655 = vmul.f32 %v544, 1.442695
        %v656 = vpow.pop %v655
        %v657 = vmul.f32 %v545, 1.442695
        %v658 = vpow.pop %v657
        %v659 = vmul.f32 %v546, 1.442695
        %v660 = vpow.pop %v659
        %v661 = vmul.f32 %v547, 1.442695
        %v662 = vpow.pop %v661
        %v663 = vmul.f32 %v548, 1.442695
        %v664 = vpow.pop %v663
        %v665 = vmul.f32 %v549, 1.442695
        %v666 = vpow.pop %v665
        %v667 = vmul.f32 %v550, 1.442695
        %v668 = vpow.pop %v667
        %v669 = vmul.f32 %v551, 1.442695
        %v670 = vpow.pop %v669
        %v671 = vmul.f32 %v552, 1.442695
        %v672 = vpow.pop %v671
        %v673 = vmul.f32 %v553, 1.442695
        %v674 = vpow.pop %v673
        %v675 = vmul.f32 %v554, 1.442695
        %v676 = vpow.pop %v675
        %v677 = vmul.f32 %v555, 1.442695
        %v678 = vpow.pop %v677
        %v679 = vmul.f32 %v556, 1.442695
        %v680 = vpow.pop %v679
        %v681 = vmul.f32 %v557, 1.442695
        %v682 = vpow.pop %v681
        %v683 = vmul.f32 %v558, 1.442695
        %v684 = vpow.pop %v683
        %v685 = vmul.f32 %v559, 1.442695
        %v686 = vpow.pop %v685
        %v687 = vmul.f32 %v560, 1.442695
        %v688 = vpow.pop %v687
        %v689 = vadd.f32 %v562, 1.0
        %v690 = vadd.f32 %v564, 1.0
        %v691 = vadd.f32 %v566, 1.0
        %v692 = vadd.f32 %v568, 1.0
        %v693 = vadd.f32 %v570, 1.0
        %v694 = vadd.f32 %v572, 1.0
        %v695 = vadd.f32 %v574, 1.0
        %v696 = vadd.f32 %v576, 1.0
        %v697 = vadd.f32 %v578, 1.0
        %v698 = vadd.f32 %v580, 1.0
        %v699 = vadd.f32 %v582, 1.0
        %v700 = vadd.f32 %v584, 1.0
        %v701 = vadd.f32 %v586, 1.0
        %v702 = vadd.f32 %v588, 1.0
        %v703 = vadd.f32 %v590, 1.0
        %v704 = vadd.f32 %v592, 1.0
        %v705 = vadd.f32 %v594, 1.0
        %v706 = vadd.f32 %v596, 1.0
        %v707 = vadd.f32 %v598, 1.0
        %v708 = vadd.f32 %v600, 1.0
        %v709 = vadd.f32 %v602, 1.0
        %v710 = vadd.f32 %v604, 1.0
        %v711 = vadd.f32 %v606, 1.0
        %v712 = vadd.f32 %v608, 1.0
        %v713 = vadd.f32 %v610, 1.0
        %v714 = vadd.f32 %v612, 1.0
        %v715 = vadd.f32 %v614, 1.0
        %v716 = vadd.f32 %v616, 1.0
        %v717 = vadd.f32 %v618, 1.0
        %v718 = vadd.f32 %v620, 1.0
        %v719 = vadd.f32 %v622, 1.0
        %v720 = vadd.f32 %v624, 1.0
        %v721 = vadd.f32 %v626, 1.0
        %v722 = vadd.f32 %v628, 1.0
        %v723 = vadd.f32 %v630, 1.0
        %v724 = vadd.f32 %v632, 1.0
        %v725 = vadd.f32 %v634, 1.0
        %v726 = vadd.f32 %v636, 1.0
        %v727 = vadd.f32 %v638, 1.0
        %v728 = vadd.f32 %v640, 1.0
        %v729 = vadd.f32 %v642, 1.0
        %v730 = vadd.f32 %v644, 1.0
        %v731 = vadd.f32 %v646, 1.0
        %v732 = vadd.f32 %v648, 1.0
        %v733 = vadd.f32 %v650, 1.0
        %v734 = vadd.f32 %v652, 1.0
        %v735 = vadd.f32 %v654, 1.0
        %v736 = vadd.f32 %v656, 1.0
        %v737 = vadd.f32 %v658, 1.0
        %v738 = vadd.f32 %v660, 1.0
        %v739 = vadd.f32 %v662, 1.0
        %v740 = vadd.f32 %v664, 1.0
        %v741 = vadd.f32 %v666, 1.0
        %v742 = vadd.f32 %v668, 1.0
        %v743 = vadd.f32 %v670, 1.0
        %v744 = vadd.f32 %v672, 1.0
        %v745 = vadd.f32 %v674, 1.0
        %v746 = vadd.f32 %v676, 1.0
        %v747 = vadd.f32 %v678, 1.0
        %v748 = vadd.f32 %v680, 1.0
        %v749 = vadd.f32 %v682, 1.0
        %v750 = vadd.f32 %v684, 1.0
        %v751 = vadd.f32 %v686, 1.0
        %v752 = vadd.f32 %v688, 1.0
        %v753 = vrcp.pop %v689
        %v754 = vmul.f32 %v689, %v753
        %v755 = vsub.f32 1.0, %v754
        %v756 = vmul.f32 %v753, %v755
        %v757 = vadd.f32 %v753, %v756
        %vm758 = vweird.f32 %v689
        %vm759 = vweird.f32 %v753
        %vm760 = vmor %vm758, %vm759
        %v761 = vsel %vm760, %v753, %v757
        %v762 = vand.u32 2147483647, %v689
        %vm763 = vcmp.eq.f32.partialorder %v762, 8.507059e+37
        %v764 = vand.u32 %v689, 2147483648
        %v765 = vor.u32 1.1754944e-38, %v764
        %v766 = vsel %vm763, %v765, %v761
        %v767 = vmul.f32 1.0, %v766
        %v768 = vrcp.pop %v690
        %v769 = vmul.f32 %v690, %v768
        %v770 = vsub.f32 1.0, %v769
        %v771 = vmul.f32 %v768, %v770
        %v772 = vadd.f32 %v768, %v771
        %vm773 = vweird.f32 %v690
        %vm774 = vweird.f32 %v768
        %vm775 = vmor %vm773, %vm774
        %v776 = vsel %vm775, %v768, %v772
        %v777 = vand.u32 2147483647, %v690
        %vm778 = vcmp.eq.f32.partialorder %v777, 8.507059e+37
        %v779 = vand.u32 %v690, 2147483648
        %v780 = vor.u32 1.1754944e-38, %v779
        %v781 = vsel %vm778, %v780, %v776
        %v782 = vmul.f32 1.0, %v781
        %v783 = vrcp.pop %v691
        %v784 = vmul.f32 %v691, %v783
        %v785 = vsub.f32 1.0, %v784
        %v786 = vmul.f32 %v783, %v785
        %v787 = vadd.f32 %v783, %v786
        %vm788 = vweird.f32 %v691
        %vm789 = vweird.f32 %v783
        %vm790 = vmor %vm788, %vm789
        %v791 = vsel %vm790, %v783, %v787
        %v792 = vand.u32 2147483647, %v691
        %vm793 = vcmp.eq.f32.partialorder %v792, 8.507059e+37
        %v794 = vand.u32 %v691, 2147483648
        %v795 = vor.u32 1.1754944e-38, %v794
        %v796 = vsel %vm793, %v795, %v791
        %v797 = vmul.f32 1.0, %v796
        %v798 = vrcp.pop %v692
        %v799 = vmul.f32 %v692, %v798
        %v800 = vsub.f32 1.0, %v799
        %v801 = vmul.f32 %v798, %v800
        %v802 = vadd.f32 %v798, %v801
        %vm803 = vweird.f32 %v692
        %vm804 = vweird.f32 %v798
        %vm805 = vmor %vm803, %vm804
        %v806 = vsel %vm805, %v798, %v802
        %v807 = vand.u32 2147483647, %v692
        %vm808 = vcmp.eq.f32.partialorder %v807, 8.507059e+37
        %v809 = vand.u32 %v692, 2147483648
        %v810 = vor.u32 1.1754944e-38, %v809
        %v811 = vsel %vm808, %v810, %v806
        %v812 = vmul.f32 1.0, %v811
        %v813 = vrcp.pop %v693
        %v814 = vmul.f32 %v693, %v813
        %v815 = vsub.f32 1.0, %v814
        %v816 = vmul.f32 %v813, %v815
        %v817 = vadd.f32 %v813, %v816
        %vm818 = vweird.f32 %v693
        %vm819 = vweird.f32 %v813
        %vm820 = vmor %vm818, %vm819
        %v821 = vsel %vm820, %v813, %v817
        %v822 = vand.u32 2147483647, %v693
        %vm823 = vcmp.eq.f32.partialorder %v822, 8.507059e+37
        %v824 = vand.u32 %v693, 2147483648
        %v825 = vor.u32 1.1754944e-38, %v824
        %v826 = vsel %vm823, %v825, %v821
        %v827 = vmul.f32 1.0, %v826
        %v828 = vrcp.pop %v694
        %v829 = vmul.f32 %v694, %v828
        %v830 = vsub.f32 1.0, %v829
        %v831 = vmul.f32 %v828, %v830
        %v832 = vadd.f32 %v828, %v831
        %vm833 = vweird.f32 %v694
        %vm834 = vweird.f32 %v828
        %vm835 = vmor %vm833, %vm834
        %v836 = vsel %vm835, %v828, %v832
        %v837 = vand.u32 2147483647, %v694
        %vm838 = vcmp.eq.f32.partialorder %v837, 8.507059e+37
        %v839 = vand.u32 %v694, 2147483648
        %v840 = vor.u32 1.1754944e-38, %v839
        %v841 = vsel %vm838, %v840, %v836
        %v842 = vmul.f32 1.0, %v841
        %v843 = vrcp.pop %v695
        %v844 = vmul.f32 %v695, %v843
        %v845 = vsub.f32 1.0, %v844
        %v846 = vmul.f32 %v843, %v845
        %v847 = vadd.f32 %v843, %v846
        %vm848 = vweird.f32 %v695
        %vm849 = vweird.f32 %v843
        %vm850 = vmor %vm848, %vm849
        %v851 = vsel %vm850, %v843, %v847
        %v852 = vand.u32 2147483647, %v695
        %vm853 = vcmp.eq.f32.partialorder %v852, 8.507059e+37
        %v854 = vand.u32 %v695, 2147483648
        %v855 = vor.u32 1.1754944e-38, %v854
        %v856 = vsel %vm853, %v855, %v851
        %v857 = vmul.f32 1.0, %v856
        %v858 = vrcp.pop %v696
        %v859 = vmul.f32 %v696, %v858
        %v860 = vsub.f32 1.0, %v859
        %v861 = vmul.f32 %v858, %v860
        %v862 = vadd.f32 %v858, %v861
        %vm863 = vweird.f32 %v696
        %vm864 = vweird.f32 %v858
        %vm865 = vmor %vm863, %vm864
        %v866 = vsel %vm865, %v858, %v862
        %v867 = vand.u32 2147483647, %v696
        %vm868 = vcmp.eq.f32.partialorder %v867, 8.507059e+37
        %v869 = vand.u32 %v696, 2147483648
        %v870 = vor.u32 1.1754944e-38, %v869
        %v871 = vsel %vm868, %v870, %v866
        %v872 = vmul.f32 1.0, %v871
        %v873 = vrcp.pop %v697
        %v874 = vmul.f32 %v697, %v873
        %v875 = vsub.f32 1.0, %v874
        %v876 = vmul.f32 %v873, %v875
        %v877 = vadd.f32 %v873, %v876
        %vm878 = vweird.f32 %v697
        %vm879 = vweird.f32 %v873
        %vm880 = vmor %vm878, %vm879
        %v881 = vsel %vm880, %v873, %v877
        %v882 = vand.u32 2147483647, %v697
        %vm883 = vcmp.eq.f32.partialorder %v882, 8.507059e+37
        %v884 = vand.u32 %v697, 2147483648
        %v885 = vor.u32 1.1754944e-38, %v884
        %v886 = vsel %vm883, %v885, %v881
        %v887 = vmul.f32 1.0, %v886
        %v888 = vrcp.pop %v698
        %v889 = vmul.f32 %v698, %v888
        %v890 = vsub.f32 1.0, %v889
        %v891 = vmul.f32 %v888, %v890
        %v892 = vadd.f32 %v888, %v891
        %vm893 = vweird.f32 %v698
        %vm894 = vweird.f32 %v888
        %vm895 = vmor %vm893, %vm894
        %v896 = vsel %vm895, %v888, %v892
        %v897 = vand.u32 2147483647, %v698
        %vm898 = vcmp.eq.f32.partialorder %v897, 8.507059e+37
        %v899 = vand.u32 %v698, 2147483648
        %v900 = vor.u32 1.1754944e-38, %v899
        %v901 = vsel %vm898, %v900, %v896
        %v902 = vmul.f32 1.0, %v901
        %v903 = vrcp.pop %v699
        %v904 = vmul.f32 %v699, %v903
        %v905 = vsub.f32 1.0, %v904
        %v906 = vmul.f32 %v903, %v905
        %v907 = vadd.f32 %v903, %v906
        %vm908 = vweird.f32 %v699
        %vm909 = vweird.f32 %v903
        %vm910 = vmor %vm908, %vm909
        %v911 = vsel %vm910, %v903, %v907
        %v912 = vand.u32 2147483647, %v699
        %vm913 = vcmp.eq.f32.partialorder %v912, 8.507059e+37
        %v914 = vand.u32 %v699, 2147483648
        %v915 = vor.u32 1.1754944e-38, %v914
        %v916 = vsel %vm913, %v915, %v911
        %v917 = vmul.f32 1.0, %v916
        %v918 = vrcp.pop %v700
        %v919 = vmul.f32 %v700, %v918
        %v920 = vsub.f32 1.0, %v919
        %v921 = vmul.f32 %v918, %v920
        %v922 = vadd.f32 %v918, %v921
        %vm923 = vweird.f32 %v700
        %vm924 = vweird.f32 %v918
        %vm925 = vmor %vm923, %vm924
        %v926 = vsel %vm925, %v918, %v922
        %v927 = vand.u32 2147483647, %v700
        %vm928 = vcmp.eq.f32.partialorder %v927, 8.507059e+37
        %v929 = vand.u32 %v700, 2147483648
        %v930 = vor.u32 1.1754944e-38, %v929
        %v931 = vsel %vm928, %v930, %v926
        %v932 = vmul.f32 1.0, %v931
        %v933 = vrcp.pop %v701
        %v934 = vmul.f32 %v701, %v933
        %v935 = vsub.f32 1.0, %v934
        %v936 = vmul.f32 %v933, %v935
        %v937 = vadd.f32 %v933, %v936
        %vm938 = vweird.f32 %v701
        %vm939 = vweird.f32 %v933
        %vm940 = vmor %vm938, %vm939
        %v941 = vsel %vm940, %v933, %v937
        %v942 = vand.u32 2147483647, %v701
        %vm943 = vcmp.eq.f32.partialorder %v942, 8.507059e+37
        %v944 = vand.u32 %v701, 2147483648
        %v945 = vor.u32 1.1754944e-38, %v944
        %v946 = vsel %vm943, %v945, %v941
        %v947 = vmul.f32 1.0, %v946
        %v948 = vrcp.pop %v702
        %v949 = vmul.f32 %v702, %v948
        %v950 = vsub.f32 1.0, %v949
        %v951 = vmul.f32 %v948, %v950
        %v952 = vadd.f32 %v948, %v951
        %vm953 = vweird.f32 %v702
        %vm954 = vweird.f32 %v948
        %vm955 = vmor %vm953, %vm954
        %v956 = vsel %vm955, %v948, %v952
        %v957 = vand.u32 2147483647, %v702
        %vm958 = vcmp.eq.f32.partialorder %v957, 8.507059e+37
        %v959 = vand.u32 %v702, 2147483648
        %v960 = vor.u32 1.1754944e-38, %v959
        %v961 = vsel %vm958, %v960, %v956
        %v962 = vmul.f32 1.0, %v961
        %v963 = vrcp.pop %v703
        %v964 = vmul.f32 %v703, %v963
        %v965 = vsub.f32 1.0, %v964
        %v966 = vmul.f32 %v963, %v965
        %v967 = vadd.f32 %v963, %v966
        %vm968 = vweird.f32 %v703
        %vm969 = vweird.f32 %v963
        %vm970 = vmor %vm968, %vm969
        %v971 = vsel %vm970, %v963, %v967
        %v972 = vand.u32 2147483647, %v703
        %vm973 = vcmp.eq.f32.partialorder %v972, 8.507059e+37
        %v974 = vand.u32 %v703, 2147483648
        %v975 = vor.u32 1.1754944e-38, %v974
        %v976 = vsel %vm973, %v975, %v971
        %v977 = vmul.f32 1.0, %v976
        %v978 = vrcp.pop %v704
        %v979 = vmul.f32 %v704, %v978
        %v980 = vsub.f32 1.0, %v979
        %v981 = vmul.f32 %v978, %v980
        %v982 = vadd.f32 %v978, %v981
        %vm983 = vweird.f32 %v704
        %vm984 = vweird.f32 %v978
        %vm985 = vmor %vm983, %vm984
        %v986 = vsel %vm985, %v978, %v982
        %v987 = vand.u32 2147483647, %v704
        %vm988 = vcmp.eq.f32.partialorder %v987, 8.507059e+37
        %v989 = vand.u32 %v704, 2147483648
        %v990 = vor.u32 1.1754944e-38, %v989
        %v991 = vsel %vm988, %v990, %v986
        %v992 = vmul.f32 1.0, %v991
        %v993 = vrcp.pop %v705
        %v994 = vmul.f32 %v705, %v993
        %v995 = vsub.f32 1.0, %v994
        %v996 = vmul.f32 %v993, %v995
        %v997 = vadd.f32 %v993, %v996
        %vm998 = vweird.f32 %v705
        %vm999 = vweird.f32 %v993
        %vm1000 = vmor %vm998, %vm999
        %v1001 = vsel %vm1000, %v993, %v997
        %v1002 = vand.u32 2147483647, %v705
        %vm1003 = vcmp.eq.f32.partialorder %v1002, 8.507059e+37
        %v1004 = vand.u32 %v705, 2147483648
        %v1005 = vor.u32 1.1754944e-38, %v1004
        %v1006 = vsel %vm1003, %v1005, %v1001
        %v1007 = vmul.f32 1.0, %v1006
        %v1008 = vrcp.pop %v706
        %v1009 = vmul.f32 %v706, %v1008
        %v1010 = vsub.f32 1.0, %v1009
        %v1011 = vmul.f32 %v1008, %v1010
        %v1012 = vadd.f32 %v1008, %v1011
        %vm1013 = vweird.f32 %v706
        %vm1014 = vweird.f32 %v1008
        %vm1015 = vmor %vm1013, %vm1014
        %v1016 = vsel %vm1015, %v1008, %v1012
        %v1017 = vand.u32 2147483647, %v706
        %vm1018 = vcmp.eq.f32.partialorder %v1017, 8.507059e+37
        %v1019 = vand.u32 %v706, 2147483648
        %v1020 = vor.u32 1.1754944e-38, %v1019
        %v1021 = vsel %vm1018, %v1020, %v1016
        %v1022 = vmul.f32 1.0, %v1021
        %v1023 = vrcp.pop %v707
        %v1024 = vmul.f32 %v707, %v1023
        %v1025 = vsub.f32 1.0, %v1024
        %v1026 = vmul.f32 %v1023, %v1025
        %v1027 = vadd.f32 %v1023, %v1026
        %vm1028 = vweird.f32 %v707
        %vm1029 = vweird.f32 %v1023
        %vm1030 = vmor %vm1028, %vm1029
        %v1031 = vsel %vm1030, %v1023, %v1027
        %v1032 = vand.u32 2147483647, %v707
        %vm1033 = vcmp.eq.f32.partialorder %v1032, 8.507059e+37
        %v1034 = vand.u32 %v707, 2147483648
        %v1035 = vor.u32 1.1754944e-38, %v1034
        %v1036 = vsel %vm1033, %v1035, %v1031
        %v1037 = vmul.f32 1.0, %v1036
        %v1038 = vrcp.pop %v708
        %v1039 = vmul.f32 %v708, %v1038
        %v1040 = vsub.f32 1.0, %v1039
        %v1041 = vmul.f32 %v1038, %v1040
        %v1042 = vadd.f32 %v1038, %v1041
        %vm1043 = vweird.f32 %v708
        %vm1044 = vweird.f32 %v1038
        %vm1045 = vmor %vm1043, %vm1044
        %v1046 = vsel %vm1045, %v1038, %v1042
        %v1047 = vand.u32 2147483647, %v708
        %vm1048 = vcmp.eq.f32.partialorder %v1047, 8.507059e+37
        %v1049 = vand.u32 %v708, 2147483648
        %v1050 = vor.u32 1.1754944e-38, %v1049
        %v1051 = vsel %vm1048, %v1050, %v1046
        %v1052 = vmul.f32 1.0, %v1051
        %v1053 = vrcp.pop %v709
        %v1054 = vmul.f32 %v709, %v1053
        %v1055 = vsub.f32 1.0, %v1054
        %v1056 = vmul.f32 %v1053, %v1055
        %v1057 = vadd.f32 %v1053, %v1056
        %vm1058 = vweird.f32 %v709
        %vm1059 = vweird.f32 %v1053
        %vm1060 = vmor %vm1058, %vm1059
        %v1061 = vsel %vm1060, %v1053, %v1057
        %v1062 = vand.u32 2147483647, %v709
        %vm1063 = vcmp.eq.f32.partialorder %v1062, 8.507059e+37
        %v1064 = vand.u32 %v709, 2147483648
        %v1065 = vor.u32 1.1754944e-38, %v1064
        %v1066 = vsel %vm1063, %v1065, %v1061
        %v1067 = vmul.f32 1.0, %v1066
        %v1068 = vrcp.pop %v710
        %v1069 = vmul.f32 %v710, %v1068
        %v1070 = vsub.f32 1.0, %v1069
        %v1071 = vmul.f32 %v1068, %v1070
        %v1072 = vadd.f32 %v1068, %v1071
        %vm1073 = vweird.f32 %v710
        %vm1074 = vweird.f32 %v1068
        %vm1075 = vmor %vm1073, %vm1074
        %v1076 = vsel %vm1075, %v1068, %v1072
        %v1077 = vand.u32 2147483647, %v710
        %vm1078 = vcmp.eq.f32.partialorder %v1077, 8.507059e+37
        %v1079 = vand.u32 %v710, 2147483648
        %v1080 = vor.u32 1.1754944e-38, %v1079
        %v1081 = vsel %vm1078, %v1080, %v1076
        %v1082 = vmul.f32 1.0, %v1081
        %v1083 = vrcp.pop %v711
        %v1084 = vmul.f32 %v711, %v1083
        %v1085 = vsub.f32 1.0, %v1084
        %v1086 = vmul.f32 %v1083, %v1085
        %v1087 = vadd.f32 %v1083, %v1086
        %vm1088 = vweird.f32 %v711
        %vm1089 = vweird.f32 %v1083
        %vm1090 = vmor %vm1088, %vm1089
        %v1091 = vsel %vm1090, %v1083, %v1087
        %v1092 = vand.u32 2147483647, %v711
        %vm1093 = vcmp.eq.f32.partialorder %v1092, 8.507059e+37
        %v1094 = vand.u32 %v711, 2147483648
        %v1095 = vor.u32 1.1754944e-38, %v1094
        %v1096 = vsel %vm1093, %v1095, %v1091
        %v1097 = vmul.f32 1.0, %v1096
        %v1098 = vrcp.pop %v712
        %v1099 = vmul.f32 %v712, %v1098
        %v1100 = vsub.f32 1.0, %v1099
        %v1101 = vmul.f32 %v1098, %v1100
        %v1102 = vadd.f32 %v1098, %v1101
        %vm1103 = vweird.f32 %v712
        %vm1104 = vweird.f32 %v1098
        %vm1105 = vmor %vm1103, %vm1104
        %v1106 = vsel %vm1105, %v1098, %v1102
        %v1107 = vand.u32 2147483647, %v712
        %vm1108 = vcmp.eq.f32.partialorder %v1107, 8.507059e+37
        %v1109 = vand.u32 %v712, 2147483648
        %v1110 = vor.u32 1.1754944e-38, %v1109
        %v1111 = vsel %vm1108, %v1110, %v1106
        %v1112 = vmul.f32 1.0, %v1111
        %v1113 = vrcp.pop %v713
        %v1114 = vmul.f32 %v713, %v1113
        %v1115 = vsub.f32 1.0, %v1114
        %v1116 = vmul.f32 %v1113, %v1115
        %v1117 = vadd.f32 %v1113, %v1116
        %vm1118 = vweird.f32 %v713
        %vm1119 = vweird.f32 %v1113
        %vm1120 = vmor %vm1118, %vm1119
        %v1121 = vsel %vm1120, %v1113, %v1117
        %v1122 = vand.u32 2147483647, %v713
        %vm1123 = vcmp.eq.f32.partialorder %v1122, 8.507059e+37
        %v1124 = vand.u32 %v713, 2147483648
        %v1125 = vor.u32 1.1754944e-38, %v1124
        %v1126 = vsel %vm1123, %v1125, %v1121
        %v1127 = vmul.f32 1.0, %v1126
        %v1128 = vrcp.pop %v714
        %v1129 = vmul.f32 %v714, %v1128
        %v1130 = vsub.f32 1.0, %v1129
        %v1131 = vmul.f32 %v1128, %v1130
        %v1132 = vadd.f32 %v1128, %v1131
        %vm1133 = vweird.f32 %v714
        %vm1134 = vweird.f32 %v1128
        %vm1135 = vmor %vm1133, %vm1134
        %v1136 = vsel %vm1135, %v1128, %v1132
        %v1137 = vand.u32 2147483647, %v714
        %vm1138 = vcmp.eq.f32.partialorder %v1137, 8.507059e+37
        %v1139 = vand.u32 %v714, 2147483648
        %v1140 = vor.u32 1.1754944e-38, %v1139
        %v1141 = vsel %vm1138, %v1140, %v1136
        %v1142 = vmul.f32 1.0, %v1141
        %v1143 = vrcp.pop %v715
        %v1144 = vmul.f32 %v715, %v1143
        %v1145 = vsub.f32 1.0, %v1144
        %v1146 = vmul.f32 %v1143, %v1145
        %v1147 = vadd.f32 %v1143, %v1146
        %vm1148 = vweird.f32 %v715
        %vm1149 = vweird.f32 %v1143
        %vm1150 = vmor %vm1148, %vm1149
        %v1151 = vsel %vm1150, %v1143, %v1147
        %v1152 = vand.u32 2147483647, %v715
        %vm1153 = vcmp.eq.f32.partialorder %v1152, 8.507059e+37
        %v1154 = vand.u32 %v715, 2147483648
        %v1155 = vor.u32 1.1754944e-38, %v1154
        %v1156 = vsel %vm1153, %v1155, %v1151
        %v1157 = vmul.f32 1.0, %v1156
        %v1158 = vrcp.pop %v716
        %v1159 = vmul.f32 %v716, %v1158
        %v1160 = vsub.f32 1.0, %v1159
        %v1161 = vmul.f32 %v1158, %v1160
        %v1162 = vadd.f32 %v1158, %v1161
        %vm1163 = vweird.f32 %v716
        %vm1164 = vweird.f32 %v1158
        %vm1165 = vmor %vm1163, %vm1164
        %v1166 = vsel %vm1165, %v1158, %v1162
        %v1167 = vand.u32 2147483647, %v716
        %vm1168 = vcmp.eq.f32.partialorder %v1167, 8.507059e+37
        %v1169 = vand.u32 %v716, 2147483648
        %v1170 = vor.u32 1.1754944e-38, %v1169
        %v1171 = vsel %vm1168, %v1170, %v1166
        %v1172 = vmul.f32 1.0, %v1171
        %v1173 = vrcp.pop %v717
        %v1174 = vmul.f32 %v717, %v1173
        %v1175 = vsub.f32 1.0, %v1174
        %v1176 = vmul.f32 %v1173, %v1175
        %v1177 = vadd.f32 %v1173, %v1176
        %vm1178 = vweird.f32 %v717
        %vm1179 = vweird.f32 %v1173
        %vm1180 = vmor %vm1178, %vm1179
        %v1181 = vsel %vm1180, %v1173, %v1177
        %v1182 = vand.u32 2147483647, %v717
        %vm1183 = vcmp.eq.f32.partialorder %v1182, 8.507059e+37
        %v1184 = vand.u32 %v717, 2147483648
        %v1185 = vor.u32 1.1754944e-38, %v1184
        %v1186 = vsel %vm1183, %v1185, %v1181
        %v1187 = vmul.f32 1.0, %v1186
        %v1188 = vrcp.pop %v718
        %v1189 = vmul.f32 %v718, %v1188
        %v1190 = vsub.f32 1.0, %v1189
        %v1191 = vmul.f32 %v1188, %v1190
        %v1192 = vadd.f32 %v1188, %v1191
        %vm1193 = vweird.f32 %v718
        %vm1194 = vweird.f32 %v1188
        %vm1195 = vmor %vm1193, %vm1194
        %v1196 = vsel %vm1195, %v1188, %v1192
        %v1197 = vand.u32 2147483647, %v718
        %vm1198 = vcmp.eq.f32.partialorder %v1197, 8.507059e+37
        %v1199 = vand.u32 %v718, 2147483648
        %v1200 = vor.u32 1.1754944e-38, %v1199
        %v1201 = vsel %vm1198, %v1200, %v1196
        %v1202 = vmul.f32 1.0, %v1201
        %v1203 = vrcp.pop %v719
        %v1204 = vmul.f32 %v719, %v1203
        %v1205 = vsub.f32 1.0, %v1204
        %v1206 = vmul.f32 %v1203, %v1205
        %v1207 = vadd.f32 %v1203, %v1206
        %vm1208 = vweird.f32 %v719
        %vm1209 = vweird.f32 %v1203
        %vm1210 = vmor %vm1208, %vm1209
        %v1211 = vsel %vm1210, %v1203, %v1207
        %v1212 = vand.u32 2147483647, %v719
        %vm1213 = vcmp.eq.f32.partialorder %v1212, 8.507059e+37
        %v1214 = vand.u32 %v719, 2147483648
        %v1215 = vor.u32 1.1754944e-38, %v1214
        %v1216 = vsel %vm1213, %v1215, %v1211
        %v1217 = vmul.f32 1.0, %v1216
        %v1218 = vrcp.pop %v720
        %v1219 = vmul.f32 %v720, %v1218
        %v1220 = vsub.f32 1.0, %v1219
        %v1221 = vmul.f32 %v1218, %v1220
        %v1222 = vadd.f32 %v1218, %v1221
        %vm1223 = vweird.f32 %v720
        %vm1224 = vweird.f32 %v1218
        %vm1225 = vmor %vm1223, %vm1224
        %v1226 = vsel %vm1225, %v1218, %v1222
        %v1227 = vand.u32 2147483647, %v720
        %vm1228 = vcmp.eq.f32.partialorder %v1227, 8.507059e+37
        %v1229 = vand.u32 %v720, 2147483648
        %v1230 = vor.u32 1.1754944e-38, %v1229
        %v1231 = vsel %vm1228, %v1230, %v1226
        %v1232 = vmul.f32 1.0, %v1231
        %v1233 = vrcp.pop %v721
        %v1234 = vmul.f32 %v721, %v1233
        %v1235 = vsub.f32 1.0, %v1234
        %v1236 = vmul.f32 %v1233, %v1235
        %v1237 = vadd.f32 %v1233, %v1236
        %vm1238 = vweird.f32 %v721
        %vm1239 = vweird.f32 %v1233
        %vm1240 = vmor %vm1238, %vm1239
        %v1241 = vsel %vm1240, %v1233, %v1237
        %v1242 = vand.u32 2147483647, %v721
        %vm1243 = vcmp.eq.f32.partialorder %v1242, 8.507059e+37
        %v1244 = vand.u32 %v721, 2147483648
        %v1245 = vor.u32 1.1754944e-38, %v1244
        %v1246 = vsel %vm1243, %v1245, %v1241
        %v1247 = vmul.f32 1.0, %v1246
        %v1248 = vrcp.pop %v722
        %v1249 = vmul.f32 %v722, %v1248
        %v1250 = vsub.f32 1.0, %v1249
        %v1251 = vmul.f32 %v1248, %v1250
        %v1252 = vadd.f32 %v1248, %v1251
        %vm1253 = vweird.f32 %v722
        %vm1254 = vweird.f32 %v1248
        %vm1255 = vmor %vm1253, %vm1254
        %v1256 = vsel %vm1255, %v1248, %v1252
        %v1257 = vand.u32 2147483647, %v722
        %vm1258 = vcmp.eq.f32.partialorder %v1257, 8.507059e+37
        %v1259 = vand.u32 %v722, 2147483648
        %v1260 = vor.u32 1.1754944e-38, %v1259
        %v1261 = vsel %vm1258, %v1260, %v1256
        %v1262 = vmul.f32 1.0, %v1261
        %v1263 = vrcp.pop %v723
        %v1264 = vmul.f32 %v723, %v1263
        %v1265 = vsub.f32 1.0, %v1264
        %v1266 = vmul.f32 %v1263, %v1265
        %v1267 = vadd.f32 %v1263, %v1266
        %vm1268 = vweird.f32 %v723
        %vm1269 = vweird.f32 %v1263
        %vm1270 = vmor %vm1268, %vm1269
        %v1271 = vsel %vm1270, %v1263, %v1267
        %v1272 = vand.u32 2147483647, %v723
        %vm1273 = vcmp.eq.f32.partialorder %v1272, 8.507059e+37
        %v1274 = vand.u32 %v723, 2147483648
        %v1275 = vor.u32 1.1754944e-38, %v1274
        %v1276 = vsel %vm1273, %v1275, %v1271
        %v1277 = vmul.f32 1.0, %v1276
        %v1278 = vrcp.pop %v724
        %v1279 = vmul.f32 %v724, %v1278
        %v1280 = vsub.f32 1.0, %v1279
        %v1281 = vmul.f32 %v1278, %v1280
        %v1282 = vadd.f32 %v1278, %v1281
        %vm1283 = vweird.f32 %v724
        %vm1284 = vweird.f32 %v1278
        %vm1285 = vmor %vm1283, %vm1284
        %v1286 = vsel %vm1285, %v1278, %v1282
        %v1287 = vand.u32 2147483647, %v724
        %vm1288 = vcmp.eq.f32.partialorder %v1287, 8.507059e+37
        %v1289 = vand.u32 %v724, 2147483648
        %v1290 = vor.u32 1.1754944e-38, %v1289
        %v1291 = vsel %vm1288, %v1290, %v1286
        %v1292 = vmul.f32 1.0, %v1291
        %v1293 = vrcp.pop %v725
        %v1294 = vmul.f32 %v725, %v1293
        %v1295 = vsub.f32 1.0, %v1294
        %v1296 = vmul.f32 %v1293, %v1295
        %v1297 = vadd.f32 %v1293, %v1296
        %vm1298 = vweird.f32 %v725
        %vm1299 = vweird.f32 %v1293
        %vm1300 = vmor %vm1298, %vm1299
        %v1301 = vsel %vm1300, %v1293, %v1297
        %v1302 = vand.u32 2147483647, %v725
        %vm1303 = vcmp.eq.f32.partialorder %v1302, 8.507059e+37
        %v1304 = vand.u32 %v725, 2147483648
        %v1305 = vor.u32 1.1754944e-38, %v1304
        %v1306 = vsel %vm1303, %v1305, %v1301
        %v1307 = vmul.f32 1.0, %v1306
        %v1308 = vrcp.pop %v726
        %v1309 = vmul.f32 %v726, %v1308
        %v1310 = vsub.f32 1.0, %v1309
        %v1311 = vmul.f32 %v1308, %v1310
        %v1312 = vadd.f32 %v1308, %v1311
        %vm1313 = vweird.f32 %v726
        %vm1314 = vweird.f32 %v1308
        %vm1315 = vmor %vm1313, %vm1314
        %v1316 = vsel %vm1315, %v1308, %v1312
        %v1317 = vand.u32 2147483647, %v726
        %vm1318 = vcmp.eq.f32.partialorder %v1317, 8.507059e+37
        %v1319 = vand.u32 %v726, 2147483648
        %v1320 = vor.u32 1.1754944e-38, %v1319
        %v1321 = vsel %vm1318, %v1320, %v1316
        %v1322 = vmul.f32 1.0, %v1321
        %v1323 = vrcp.pop %v727
        %v1324 = vmul.f32 %v727, %v1323
        %v1325 = vsub.f32 1.0, %v1324
        %v1326 = vmul.f32 %v1323, %v1325
        %v1327 = vadd.f32 %v1323, %v1326
        %vm1328 = vweird.f32 %v727
        %vm1329 = vweird.f32 %v1323
        %vm1330 = vmor %vm1328, %vm1329
        %v1331 = vsel %vm1330, %v1323, %v1327
        %v1332 = vand.u32 2147483647, %v727
        %vm1333 = vcmp.eq.f32.partialorder %v1332, 8.507059e+37
        %v1334 = vand.u32 %v727, 2147483648
        %v1335 = vor.u32 1.1754944e-38, %v1334
        %v1336 = vsel %vm1333, %v1335, %v1331
        %v1337 = vmul.f32 1.0, %v1336
        %v1338 = vrcp.pop %v728
        %v1339 = vmul.f32 %v728, %v1338
        %v1340 = vsub.f32 1.0, %v1339
        %v1341 = vmul.f32 %v1338, %v1340
        %v1342 = vadd.f32 %v1338, %v1341
        %vm1343 = vweird.f32 %v728
        %vm1344 = vweird.f32 %v1338
        %vm1345 = vmor %vm1343, %vm1344
        %v1346 = vsel %vm1345, %v1338, %v1342
        %v1347 = vand.u32 2147483647, %v728
        %vm1348 = vcmp.eq.f32.partialorder %v1347, 8.507059e+37
        %v1349 = vand.u32 %v728, 2147483648
        %v1350 = vor.u32 1.1754944e-38, %v1349
        %v1351 = vsel %vm1348, %v1350, %v1346
        %v1352 = vmul.f32 1.0, %v1351
        %v1353 = vrcp.pop %v729
        %v1354 = vmul.f32 %v729, %v1353
        %v1355 = vsub.f32 1.0, %v1354
        %v1356 = vmul.f32 %v1353, %v1355
        %v1357 = vadd.f32 %v1353, %v1356
        %vm1358 = vweird.f32 %v729
        %vm1359 = vweird.f32 %v1353
        %vm1360 = vmor %vm1358, %vm1359
        %v1361 = vsel %vm1360, %v1353, %v1357
        %v1362 = vand.u32 2147483647, %v729
        %vm1363 = vcmp.eq.f32.partialorder %v1362, 8.507059e+37
        %v1364 = vand.u32 %v729, 2147483648
        %v1365 = vor.u32 1.1754944e-38, %v1364
        %v1366 = vsel %vm1363, %v1365, %v1361
        %v1367 = vmul.f32 1.0, %v1366
        %v1368 = vrcp.pop %v730
        %v1369 = vmul.f32 %v730, %v1368
        %v1370 = vsub.f32 1.0, %v1369
        %v1371 = vmul.f32 %v1368, %v1370
        %v1372 = vadd.f32 %v1368, %v1371
        %vm1373 = vweird.f32 %v730
        %vm1374 = vweird.f32 %v1368
        %vm1375 = vmor %vm1373, %vm1374
        %v1376 = vsel %vm1375, %v1368, %v1372
        %v1377 = vand.u32 2147483647, %v730
        %vm1378 = vcmp.eq.f32.partialorder %v1377, 8.507059e+37
        %v1379 = vand.u32 %v730, 2147483648
        %v1380 = vor.u32 1.1754944e-38, %v1379
        %v1381 = vsel %vm1378, %v1380, %v1376
        %v1382 = vmul.f32 1.0, %v1381
        %v1383 = vrcp.pop %v731
        %v1384 = vmul.f32 %v731, %v1383
        %v1385 = vsub.f32 1.0, %v1384
        %v1386 = vmul.f32 %v1383, %v1385
        %v1387 = vadd.f32 %v1383, %v1386
        %vm1388 = vweird.f32 %v731
        %vm1389 = vweird.f32 %v1383
        %vm1390 = vmor %vm1388, %vm1389
        %v1391 = vsel %vm1390, %v1383, %v1387
        %v1392 = vand.u32 2147483647, %v731
        %vm1393 = vcmp.eq.f32.partialorder %v1392, 8.507059e+37
        %v1394 = vand.u32 %v731, 2147483648
        %v1395 = vor.u32 1.1754944e-38, %v1394
        %v1396 = vsel %vm1393, %v1395, %v1391
        %v1397 = vmul.f32 1.0, %v1396
        %v1398 = vrcp.pop %v732
        %v1399 = vmul.f32 %v732, %v1398
        %v1400 = vsub.f32 1.0, %v1399
        %v1401 = vmul.f32 %v1398, %v1400
        %v1402 = vadd.f32 %v1398, %v1401
        %vm1403 = vweird.f32 %v732
        %vm1404 = vweird.f32 %v1398
        %vm1405 = vmor %vm1403, %vm1404
        %v1406 = vsel %vm1405, %v1398, %v1402
        %v1407 = vand.u32 2147483647, %v732
        %vm1408 = vcmp.eq.f32.partialorder %v1407, 8.507059e+37
        %v1409 = vand.u32 %v732, 2147483648
        %v1410 = vor.u32 1.1754944e-38, %v1409
        %v1411 = vsel %vm1408, %v1410, %v1406
        %v1412 = vmul.f32 1.0, %v1411
        %v1413 = vrcp.pop %v733
        %v1414 = vmul.f32 %v733, %v1413
        %v1415 = vsub.f32 1.0, %v1414
        %v1416 = vmul.f32 %v1413, %v1415
        %v1417 = vadd.f32 %v1413, %v1416
        %vm1418 = vweird.f32 %v733
        %vm1419 = vweird.f32 %v1413
        %vm1420 = vmor %vm1418, %vm1419
        %v1421 = vsel %vm1420, %v1413, %v1417
        %v1422 = vand.u32 2147483647, %v733
        %vm1423 = vcmp.eq.f32.partialorder %v1422, 8.507059e+37
        %v1424 = vand.u32 %v733, 2147483648
        %v1425 = vor.u32 1.1754944e-38, %v1424
        %v1426 = vsel %vm1423, %v1425, %v1421
        %v1427 = vmul.f32 1.0, %v1426
        %v1428 = vrcp.pop %v734
        %v1429 = vmul.f32 %v734, %v1428
        %v1430 = vsub.f32 1.0, %v1429
        %v1431 = vmul.f32 %v1428, %v1430
        %v1432 = vadd.f32 %v1428, %v1431
        %vm1433 = vweird.f32 %v734
        %vm1434 = vweird.f32 %v1428
        %vm1435 = vmor %vm1433, %vm1434
        %v1436 = vsel %vm1435, %v1428, %v1432
        %v1437 = vand.u32 2147483647, %v734
        %vm1438 = vcmp.eq.f32.partialorder %v1437, 8.507059e+37
        %v1439 = vand.u32 %v734, 2147483648
        %v1440 = vor.u32 1.1754944e-38, %v1439
        %v1441 = vsel %vm1438, %v1440, %v1436
        %v1442 = vmul.f32 1.0, %v1441
        %v1443 = vrcp.pop %v735
        %v1444 = vmul.f32 %v735, %v1443
        %v1445 = vsub.f32 1.0, %v1444
        %v1446 = vmul.f32 %v1443, %v1445
        %v1447 = vadd.f32 %v1443, %v1446
        %vm1448 = vweird.f32 %v735
        %vm1449 = vweird.f32 %v1443
        %vm1450 = vmor %vm1448, %vm1449
        %v1451 = vsel %vm1450, %v1443, %v1447
        %v1452 = vand.u32 2147483647, %v735
        %vm1453 = vcmp.eq.f32.partialorder %v1452, 8.507059e+37
        %v1454 = vand.u32 %v735, 2147483648
        %v1455 = vor.u32 1.1754944e-38, %v1454
        %v1456 = vsel %vm1453, %v1455, %v1451
        %v1457 = vmul.f32 1.0, %v1456
        %v1458 = vrcp.pop %v736
        %v1459 = vmul.f32 %v736, %v1458
        %v1460 = vsub.f32 1.0, %v1459
        %v1461 = vmul.f32 %v1458, %v1460
        %v1462 = vadd.f32 %v1458, %v1461
        %vm1463 = vweird.f32 %v736
        %vm1464 = vweird.f32 %v1458
        %vm1465 = vmor %vm1463, %vm1464
        %v1466 = vsel %vm1465, %v1458, %v1462
        %v1467 = vand.u32 2147483647, %v736
        %vm1468 = vcmp.eq.f32.partialorder %v1467, 8.507059e+37
        %v1469 = vand.u32 %v736, 2147483648
        %v1470 = vor.u32 1.1754944e-38, %v1469
        %v1471 = vsel %vm1468, %v1470, %v1466
        %v1472 = vmul.f32 1.0, %v1471
        %v1473 = vrcp.pop %v737
        %v1474 = vmul.f32 %v737, %v1473
        %v1475 = vsub.f32 1.0, %v1474
        %v1476 = vmul.f32 %v1473, %v1475
        %v1477 = vadd.f32 %v1473, %v1476
        %vm1478 = vweird.f32 %v737
        %vm1479 = vweird.f32 %v1473
        %vm1480 = vmor %vm1478, %vm1479
        %v1481 = vsel %vm1480, %v1473, %v1477
        %v1482 = vand.u32 2147483647, %v737
        %vm1483 = vcmp.eq.f32.partialorder %v1482, 8.507059e+37
        %v1484 = vand.u32 %v737, 2147483648
        %v1485 = vor.u32 1.1754944e-38, %v1484
        %v1486 = vsel %vm1483, %v1485, %v1481
        %v1487 = vmul.f32 1.0, %v1486
        %v1488 = vrcp.pop %v738
        %v1489 = vmul.f32 %v738, %v1488
        %v1490 = vsub.f32 1.0, %v1489
        %v1491 = vmul.f32 %v1488, %v1490
        %v1492 = vadd.f32 %v1488, %v1491
        %vm1493 = vweird.f32 %v738
        %vm1494 = vweird.f32 %v1488
        %vm1495 = vmor %vm1493, %vm1494
        %v1496 = vsel %vm1495, %v1488, %v1492
        %v1497 = vand.u32 2147483647, %v738
        %vm1498 = vcmp.eq.f32.partialorder %v1497, 8.507059e+37
        %v1499 = vand.u32 %v738, 2147483648
        %v1500 = vor.u32 1.1754944e-38, %v1499
        %v1501 = vsel %vm1498, %v1500, %v1496
        %v1502 = vmul.f32 1.0, %v1501
        %v1503 = vrcp.pop %v739
        %v1504 = vmul.f32 %v739, %v1503
        %v1505 = vsub.f32 1.0, %v1504
        %v1506 = vmul.f32 %v1503, %v1505
        %v1507 = vadd.f32 %v1503, %v1506
        %vm1508 = vweird.f32 %v739
        %vm1509 = vweird.f32 %v1503
        %vm1510 = vmor %vm1508, %vm1509
        %v1511 = vsel %vm1510, %v1503, %v1507
        %v1512 = vand.u32 2147483647, %v739
        %vm1513 = vcmp.eq.f32.partialorder %v1512, 8.507059e+37
        %v1514 = vand.u32 %v739, 2147483648
        %v1515 = vor.u32 1.1754944e-38, %v1514
        %v1516 = vsel %vm1513, %v1515, %v1511
        %v1517 = vmul.f32 1.0, %v1516
        %v1518 = vrcp.pop %v740
        %v1519 = vmul.f32 %v740, %v1518
        %v1520 = vsub.f32 1.0, %v1519
        %v1521 = vmul.f32 %v1518, %v1520
        %v1522 = vadd.f32 %v1518, %v1521
        %vm1523 = vweird.f32 %v740
        %vm1524 = vweird.f32 %v1518
        %vm1525 = vmor %vm1523, %vm1524
        %v1526 = vsel %vm1525, %v1518, %v1522
        %v1527 = vand.u32 2147483647, %v740
        %vm1528 = vcmp.eq.f32.partialorder %v1527, 8.507059e+37
        %v1529 = vand.u32 %v740, 2147483648
        %v1530 = vor.u32 1.1754944e-38, %v1529
        %v1531 = vsel %vm1528, %v1530, %v1526
        %v1532 = vmul.f32 1.0, %v1531
        %v1533 = vrcp.pop %v741
        %v1534 = vmul.f32 %v741, %v1533
        %v1535 = vsub.f32 1.0, %v1534
        %v1536 = vmul.f32 %v1533, %v1535
        %v1537 = vadd.f32 %v1533, %v1536
        %vm1538 = vweird.f32 %v741
        %vm1539 = vweird.f32 %v1533
        %vm1540 = vmor %vm1538, %vm1539
        %v1541 = vsel %vm1540, %v1533, %v1537
        %v1542 = vand.u32 2147483647, %v741
        %vm1543 = vcmp.eq.f32.partialorder %v1542, 8.507059e+37
        %v1544 = vand.u32 %v741, 2147483648
        %v1545 = vor.u32 1.1754944e-38, %v1544
        %v1546 = vsel %vm1543, %v1545, %v1541
        %v1547 = vmul.f32 1.0, %v1546
        %v1548 = vrcp.pop %v742
        %v1549 = vmul.f32 %v742, %v1548
        %v1550 = vsub.f32 1.0, %v1549
        %v1551 = vmul.f32 %v1548, %v1550
        %v1552 = vadd.f32 %v1548, %v1551
        %vm1553 = vweird.f32 %v742
        %vm1554 = vweird.f32 %v1548
        %vm1555 = vmor %vm1553, %vm1554
        %v1556 = vsel %vm1555, %v1548, %v1552
        %v1557 = vand.u32 2147483647, %v742
        %vm1558 = vcmp.eq.f32.partialorder %v1557, 8.507059e+37
        %v1559 = vand.u32 %v742, 2147483648
        %v1560 = vor.u32 1.1754944e-38, %v1559
        %v1561 = vsel %vm1558, %v1560, %v1556
        %v1562 = vmul.f32 1.0, %v1561
        %v1563 = vrcp.pop %v743
        %v1564 = vmul.f32 %v743, %v1563
        %v1565 = vsub.f32 1.0, %v1564
        %v1566 = vmul.f32 %v1563, %v1565
        %v1567 = vadd.f32 %v1563, %v1566
        %vm1568 = vweird.f32 %v743
        %vm1569 = vweird.f32 %v1563
        %vm1570 = vmor %vm1568, %vm1569
        %v1571 = vsel %vm1570, %v1563, %v1567
        %v1572 = vand.u32 2147483647, %v743
        %vm1573 = vcmp.eq.f32.partialorder %v1572, 8.507059e+37
        %v1574 = vand.u32 %v743, 2147483648
        %v1575 = vor.u32 1.1754944e-38, %v1574
        %v1576 = vsel %vm1573, %v1575, %v1571
        %v1577 = vmul.f32 1.0, %v1576
        %v1578 = vrcp.pop %v744
        %v1579 = vmul.f32 %v744, %v1578
        %v1580 = vsub.f32 1.0, %v1579
        %v1581 = vmul.f32 %v1578, %v1580
        %v1582 = vadd.f32 %v1578, %v1581
        %vm1583 = vweird.f32 %v744
        %vm1584 = vweird.f32 %v1578
        %vm1585 = vmor %vm1583, %vm1584
        %v1586 = vsel %vm1585, %v1578, %v1582
        %v1587 = vand.u32 2147483647, %v744
        %vm1588 = vcmp.eq.f32.partialorder %v1587, 8.507059e+37
        %v1589 = vand.u32 %v744, 2147483648
        %v1590 = vor.u32 1.1754944e-38, %v1589
        %v1591 = vsel %vm1588, %v1590, %v1586
        %v1592 = vmul.f32 1.0, %v1591
        %v1593 = vrcp.pop %v745
        %v1594 = vmul.f32 %v745, %v1593
        %v1595 = vsub.f32 1.0, %v1594
        %v1596 = vmul.f32 %v1593, %v1595
        %v1597 = vadd.f32 %v1593, %v1596
        %vm1598 = vweird.f32 %v745
        %vm1599 = vweird.f32 %v1593
        %vm1600 = vmor %vm1598, %vm1599
        %v1601 = vsel %vm1600, %v1593, %v1597
        %v1602 = vand.u32 2147483647, %v745
        %vm1603 = vcmp.eq.f32.partialorder %v1602, 8.507059e+37
        %v1604 = vand.u32 %v745, 2147483648
        %v1605 = vor.u32 1.1754944e-38, %v1604
        %v1606 = vsel %vm1603, %v1605, %v1601
        %v1607 = vmul.f32 1.0, %v1606
        %v1608 = vrcp.pop %v746
        %v1609 = vmul.f32 %v746, %v1608
        %v1610 = vsub.f32 1.0, %v1609
        %v1611 = vmul.f32 %v1608, %v1610
        %v1612 = vadd.f32 %v1608, %v1611
        %vm1613 = vweird.f32 %v746
        %vm1614 = vweird.f32 %v1608
        %vm1615 = vmor %vm1613, %vm1614
        %v1616 = vsel %vm1615, %v1608, %v1612
        %v1617 = vand.u32 2147483647, %v746
        %vm1618 = vcmp.eq.f32.partialorder %v1617, 8.507059e+37
        %v1619 = vand.u32 %v746, 2147483648
        %v1620 = vor.u32 1.1754944e-38, %v1619
        %v1621 = vsel %vm1618, %v1620, %v1616
        %v1622 = vmul.f32 1.0, %v1621
        %v1623 = vrcp.pop %v747
        %v1624 = vmul.f32 %v747, %v1623
        %v1625 = vsub.f32 1.0, %v1624
        %v1626 = vmul.f32 %v1623, %v1625
        %v1627 = vadd.f32 %v1623, %v1626
        %vm1628 = vweird.f32 %v747
        %vm1629 = vweird.f32 %v1623
        %vm1630 = vmor %vm1628, %vm1629
        %v1631 = vsel %vm1630, %v1623, %v1627
        %v1632 = vand.u32 2147483647, %v747
        %vm1633 = vcmp.eq.f32.partialorder %v1632, 8.507059e+37
        %v1634 = vand.u32 %v747, 2147483648
        %v1635 = vor.u32 1.1754944e-38, %v1634
        %v1636 = vsel %vm1633, %v1635, %v1631
        %v1637 = vmul.f32 1.0, %v1636
        %v1638 = vrcp.pop %v748
        %v1639 = vmul.f32 %v748, %v1638
        %v1640 = vsub.f32 1.0, %v1639
        %v1641 = vmul.f32 %v1638, %v1640
        %v1642 = vadd.f32 %v1638, %v1641
        %vm1643 = vweird.f32 %v748
        %vm1644 = vweird.f32 %v1638
        %vm1645 = vmor %vm1643, %vm1644
        %v1646 = vsel %vm1645, %v1638, %v1642
        %v1647 = vand.u32 2147483647, %v748
        %vm1648 = vcmp.eq.f32.partialorder %v1647, 8.507059e+37
        %v1649 = vand.u32 %v748, 2147483648
        %v1650 = vor.u32 1.1754944e-38, %v1649
        %v1651 = vsel %vm1648, %v1650, %v1646
        %v1652 = vmul.f32 1.0, %v1651
        %v1653 = vrcp.pop %v749
        %v1654 = vmul.f32 %v749, %v1653
        %v1655 = vsub.f32 1.0, %v1654
        %v1656 = vmul.f32 %v1653, %v1655
        %v1657 = vadd.f32 %v1653, %v1656
        %vm1658 = vweird.f32 %v749
        %vm1659 = vweird.f32 %v1653
        %vm1660 = vmor %vm1658, %vm1659
        %v1661 = vsel %vm1660, %v1653, %v1657
        %v1662 = vand.u32 2147483647, %v749
        %vm1663 = vcmp.eq.f32.partialorder %v1662, 8.507059e+37
        %v1664 = vand.u32 %v749, 2147483648
        %v1665 = vor.u32 1.1754944e-38, %v1664
        %v1666 = vsel %vm1663, %v1665, %v1661
        %v1667 = vmul.f32 1.0, %v1666
        %v1668 = vrcp.pop %v750
        %v1669 = vmul.f32 %v750, %v1668
        %v1670 = vsub.f32 1.0, %v1669
        %v1671 = vmul.f32 %v1668, %v1670
        %v1672 = vadd.f32 %v1668, %v1671
        %vm1673 = vweird.f32 %v750
        %vm1674 = vweird.f32 %v1668
        %vm1675 = vmor %vm1673, %vm1674
        %v1676 = vsel %vm1675, %v1668, %v1672
        %v1677 = vand.u32 2147483647, %v750
        %vm1678 = vcmp.eq.f32.partialorder %v1677, 8.507059e+37
        %v1679 = vand.u32 %v750, 2147483648
        %v1680 = vor.u32 1.1754944e-38, %v1679
        %v1681 = vsel %vm1678, %v1680, %v1676
        %v1682 = vmul.f32 1.0, %v1681
        %v1683 = vrcp.pop %v751
        %v1684 = vmul.f32 %v751, %v1683
        %v1685 = vsub.f32 1.0, %v1684
        %v1686 = vmul.f32 %v1683, %v1685
        %v1687 = vadd.f32 %v1683, %v1686
        %vm1688 = vweird.f32 %v751
        %vm1689 = vweird.f32 %v1683
        %vm1690 = vmor %vm1688, %vm1689
        %v1691 = vsel %vm1690, %v1683, %v1687
        %v1692 = vand.u32 2147483647, %v751
        %vm1693 = vcmp.eq.f32.partialorder %v1692, 8.507059e+37
        %v1694 = vand.u32 %v751, 2147483648
        %v1695 = vor.u32 1.1754944e-38, %v1694
        %v1696 = vsel %vm1693, %v1695, %v1691
        %v1697 = vmul.f32 1.0, %v1696
        %v1698 = vrcp.pop %v752
        %v1699 = vmul.f32 %v752, %v1698
        %v1700 = vsub.f32 1.0, %v1699
        %v1701 = vmul.f32 %v1698, %v1700
        %v1702 = vadd.f32 %v1698, %v1701
        %vm1703 = vweird.f32 %v752
        %vm1704 = vweird.f32 %v1698
        %vm1705 = vmor %vm1703, %vm1704
        %v1706 = vsel %vm1705, %v1698, %v1702
        %v1707 = vand.u32 2147483647, %v752
        %vm1708 = vcmp.eq.f32.partialorder %v1707, 8.507059e+37
        %v1709 = vand.u32 %v752, 2147483648
        %v1710 = vor.u32 1.1754944e-38, %v1709
        %v1711 = vsel %vm1708, %v1710, %v1706
        %v1712 = vmul.f32 1.0, %v1711
        %1713 = vst [vmem:[%s202] sm:$0xff] %v767
        %1714 = vst [vmem:[%s202 + $0x8] sm:$0xff] %v782
        %1715 = vst [vmem:[%s202 + $0x10] sm:$0xff] %v797
        %1716 = vst [vmem:[%s202 + $0x18] sm:$0xff] %v812
        %1717 = vst [vmem:[%s202 + $0x20] sm:$0xff] %v827
        %1718 = vst [vmem:[%s202 + $0x28] sm:$0xff] %v842
        %1719 = vst [vmem:[%s202 + $0x30] sm:$0xff] %v857
        %1720 = vst [vmem:[%s202 + $0x38] sm:$0xff] %v872
        %1721 = vst [vmem:[%s202 + $0x40] sm:$0xff] %v887
        %1722 = vst [vmem:[%s202 + $0x48] sm:$0xff] %v902
        %1723 = vst [vmem:[%s202 + $0x50] sm:$0xff] %v917
        %1724 = vst [vmem:[%s202 + $0x58] sm:$0xff] %v932
        %1725 = vst [vmem:[%s202 + $0x60] sm:$0xff] %v947
        %1726 = vst [vmem:[%s202 + $0x68] sm:$0xff] %v962
        %1727 = vst [vmem:[%s202 + $0x70] sm:$0xff] %v977
        %1728 = vst [vmem:[%s202 + $0x78] sm:$0xff] %v992
        %1729 = vst [vmem:[%s202 + $0x80] sm:$0xff] %v1007
        %1730 = vst [vmem:[%s202 + $0x88] sm:$0xff] %v1022
        %1731 = vst [vmem:[%s202 + $0x90] sm:$0xff] %v1037
        %1732 = vst [vmem:[%s202 + $0x98] sm:$0xff] %v1052
        %1733 = vst [vmem:[%s202 + $0xa0] sm:$0xff] %v1067
        %1734 = vst [vmem:[%s202 + $0xa8] sm:$0xff] %v1082
        %1735 = vst [vmem:[%s202 + $0xb0] sm:$0xff] %v1097
        %1736 = vst [vmem:[%s202 + $0xb8] sm:$0xff] %v1112
        %1737 = vst [vmem:[%s202 + $0xc0] sm:$0xff] %v1127
        %1738 = vst [vmem:[%s202 + $0xc8] sm:$0xff] %v1142
        %1739 = vst [vmem:[%s202 + $0xd0] sm:$0xff] %v1157
        %1740 = vst [vmem:[%s202 + $0xd8] sm:$0xff] %v1172
        %1741 = vst [vmem:[%s202 + $0xe0] sm:$0xff] %v1187
        %1742 = vst [vmem:[%s202 + $0xe8] sm:$0xff] %v1202
        %1743 = vst [vmem:[%s202 + $0xf0] sm:$0xff] %v1217
        %1744 = vst [vmem:[%s202 + $0xf8] sm:$0xff] %v1232
        %1745 = vst [vmem:[%s202 + $0x100] sm:$0xff] %v1247
        %1746 = vst [vmem:[%s202 + $0x108] sm:$0xff] %v1262
        %1747 = vst [vmem:[%s202 + $0x110] sm:$0xff] %v1277
        %1748 = vst [vmem:[%s202 + $0x118] sm:$0xff] %v1292
        %1749 = vst [vmem:[%s202 + $0x120] sm:$0xff] %v1307
        %1750 = vst [vmem:[%s202 + $0x128] sm:$0xff] %v1322
        %1751 = vst [vmem:[%s202 + $0x130] sm:$0xff] %v1337
        %1752 = vst [vmem:[%s202 + $0x138] sm:$0xff] %v1352
        %1753 = vst [vmem:[%s202 + $0x140] sm:$0xff] %v1367
        %1754 = vst [vmem:[%s202 + $0x148] sm:$0xff] %v1382
        %1755 = vst [vmem:[%s202 + $0x150] sm:$0xff] %v1397
        %1756 = vst [vmem:[%s202 + $0x158] sm:$0xff] %v1412
        %1757 = vst [vmem:[%s202 + $0x160] sm:$0xff] %v1427
        %1758 = vst [vmem:[%s202 + $0x168] sm:$0xff] %v1442
        %1759 = vst [vmem:[%s202 + $0x170] sm:$0xff] %v1457
        %1760 = vst [vmem:[%s202 + $0x178] sm:$0xff] %v1472
        %1761 = vst [vmem:[%s202 + $0x180] sm:$0xff] %v1487
        %1762 = vst [vmem:[%s202 + $0x188] sm:$0xff] %v1502
        %1763 = vst [vmem:[%s202 + $0x190] sm:$0xff] %v1517
        %1764 = vst [vmem:[%s202 + $0x198] sm:$0xff] %v1532
        %1765 = vst [vmem:[%s202 + $0x1a0] sm:$0xff] %v1547
        %1766 = vst [vmem:[%s202 + $0x1a8] sm:$0xff] %v1562
        %1767 = vst [vmem:[%s202 + $0x1b0] sm:$0xff] %v1577
        %1768 = vst [vmem:[%s202 + $0x1b8] sm:$0xff] %v1592
        %1769 = vst [vmem:[%s202 + $0x1c0] sm:$0xff] %v1607
        %1770 = vst [vmem:[%s202 + $0x1c8] sm:$0xff] %v1622
        %1771 = vst [vmem:[%s202 + $0x1d0] sm:$0xff] %v1637
        %1772 = vst [vmem:[%s202 + $0x1d8] sm:$0xff] %v1652
        %1773 = vst [vmem:[%s202 + $0x1e0] sm:$0xff] %v1667
        %1774 = vst [vmem:[%s202 + $0x1e8] sm:$0xff] %v1682
        %1775 = vst [vmem:[%s202 + $0x1f0] sm:$0xff] %v1697
        %1776 = vst [vmem:[%s202 + $0x1f8] sm:$0xff] %v1712
        %s1777 = sand.u32 %s94, 1
        %s1778 = scalar_lea.sflag [#allocation4], %s1777
        %s1779 = sand.u32 %s94, 1
        %s1780 = smul.addr %s1779, 512
        %s1781 = scalar_lea.vmem [#allocation7], %s1780
        // Predicated region
        $region37: #{tpu_custom_call.1} parent=27 // pred_check
          %p1782 = pneg %p104
        $region38: #{tpu_custom_call.1} parent=27 // pred_check_branch
          %1784 = sbr.rel (%p1782) target = $region40
        $region39: #{tpu_custom_call.1} parent=27 // pred_region
          %s1785 = smul.u32 32, %s24
          %s1786 = smul.u32 2, %s25
          %1788 = vsyncadd %s1778, 0
          %s1789 = smul.addr %s1785, 2
          %s1790 = sadd.s32 %s1786, %s1789
          %s1791 = smul.addr %s1790, 8
          %s1792 = scalar_lea.hbm %s2, %s1791
          %s1793 = sshll.u32 %s1781, 4
          %s1794 = int_to_ptr.vmem [resolvable:$true] %s1793
          %s1795 = sshll.u32 %s1792, 4
          %s1796 = int_to_ptr.hbm [resolvable:$true] %s1795
          %1801 = dma.vmem_to_hbm [thread:$0]  %s1794, 8192, %s1796, %s1778, 256, 256, 16
        $region40: #{tpu_custom_call.1} parent=27 // pred_fallthru
          _
      $region28: #{tpu_custom_call.1} parent=5 // pred_fallthru
        _
      %p1802 = scmp.le.s32.totalorder 2, %s15
      // Predicated region
      $region41: #{tpu_custom_call.1} parent=5 // pred_check
        %p1803 = pneg %p1802
      $region42: #{tpu_custom_call.1} parent=5 // pred_check_branch
        %1805 = sbr.rel (%p1803) target = $region44
      $region43: #{tpu_custom_call.1} parent=5 // pred_region
        %s1806 = ssub.s32 %s15, 2
        // Predicated region
        $region45: #{tpu_custom_call.1} parent=43 // pred_check
          %p1807 = pneg %p110
        $region46: #{tpu_custom_call.1} parent=43 // pred_check_branch
          %1809 = sbr.rel (%p1807) target = $region48
        $region47: #{tpu_custom_call.1} parent=43 // pred_region
          %s1810 = sand.u32 %s95, 1
          %s1811 = scalar_lea.sflag [#allocation4], %s1810
          %s1812 = sand.u32 %s95, 1
          %s1813 = smul.addr %s1812, 512
          %s1814 = scalar_lea.vmem [#allocation7], %s1813
          %1816 = dma.done %s1811, 8192
        $region48: #{tpu_custom_call.1} parent=43 // pred_fallthru
          _
      $region44: #{tpu_custom_call.1} parent=5 // pred_fallthru
        _
    $region6: #{tpu_custom_call.1} parent=1 // loop_footer
      %s19 = sadd.s32 1, %s15
    $region7: #{tpu_custom_call.1} parent=1 // loop_footer_branch
      %14 = sbr.rel target = $region3
    $region8: #{tpu_custom_call.1} parent=1 // loop_exit
      _
    %1817 = vsyncpa [#allocation3], 1
    %s1818 = scalar_lea.sflag [#allocation3], 1
    %1819 = vsyncpa %s1818, 1
    %1820 = vsyncpa [#allocation6], 1
    %1821 = vsyncpa [#allocation4], 1
    %s1822 = scalar_lea.sflag [#allocation4], 1
    %1823 = vsyncpa %s1822, 1

</llo_original>
